<compile_context>
chip_gen: v7x
topology: tpu7x:2x2x1
jax: 0.10.0
libtpu: 0.0.40
codegen_flags: <defaults>
</compile_context>

<pallas_src>
import functools

import jax
import jax.numpy as jnp
from jax import lax
from jax.experimental import pallas as pl
from jax.experimental.pallas import tpu as pltpu

BN_EPS = 1e-5
_VMEM_LIMIT = 32 * 1024 * 1024          # explicit scoped-VMEM budget (fits v5e/v6e/v7x)
_BUF_BUDGET = 24 * 1024 * 1024          # double-buffered streamed operands per step


def _pick_tile(n, c_in, c_out, tile_n):
    """Lane-dense tile width: multiple of 128 (or the full N), capped by a VMEM
    budget so the same config fits v7x's 64 MiB physical VMEM."""
    tile_n = max(128, (int(tile_n) // 128) * 128)
    if n <= tile_n:
        return n                        # single full-width block (full-dim exception)
    # bf16 inputs (2 planes) + f32 output, x2 for double buffering.
    per_col = 2 * (2 * c_in * 2 + 2 * c_out * 4)
    cap = max(128, (_BUF_BUDGET // per_col) // 128 * 128)
    tile = min(tile_n, cap)
    assert tile % 128 == 0
    return tile


# ---------------------------------------------------------------------------
# Pass 1: per-channel batch statistics (sum, sum-of-squares) of the pre-BN
# 1x1-conv output.  Grid = (2-way core split, reduction steps); each core owns
# its own resident (2*Cout, 1) accumulators, summed on the host afterwards.
# ---------------------------------------------------------------------------
def _stats_kernel(n_valid, tile, spc, mask_from,
                  xr_ref, xi_ref, w_ref, s_ref, ss_ref):
    core = pl.program_id(0)
    step = pl.program_id(1)

    @pl.when(step == 0)
    def _():
        s_ref[...] = jnp.zeros_like(s_ref)
        ss_ref[...] = jnp.zeros_like(ss_ref)

    # Stacked contraction: all 2*Cout (interleaved re/im) output channels at once.
    y = (jnp.dot(w_ref[0], xr_ref[...], preferred_element_type=jnp.float32)
         + jnp.dot(w_ref[1], xi_ref[...], preferred_element_type=jnp.float32))

    def _accum(yv):
        # TODO(synk): if the XLU ever binds, these cross-lane reduces can move to
        # the (mostly idle) MXU via a ones(tile, 1) dot, or pass 1 can switch to
        # the weight-independent Gram-matrix formulation.
        s_ref[...] += jnp.sum(yv, axis=1, keepdims=True)
        ss_ref[...] += jnp.sum(yv * yv, axis=1, keepdims=True)

    if mask_from is None:               # no ragged tail / padded steps at all
        _accum(y)
    else:
        gblk = core * spc + step        # unclamped global block index

        @pl.when(gblk < mask_from)
        def _():
            _accum(y)

        @pl.when(gblk >= mask_from)     # tail block and clamped duplicate steps
        def _():
            col = gblk * tile + lax.broadcasted_iota(jnp.int32, y.shape, 1)
            _accum(jnp.where(col < n_valid, y, 0.0))


def _spectral_stats(xr2d, xi2d, w_stk, tile):
    c_in, n = xr2d.shape
    cout2 = w_stk.shape[1]
    nblk = pl.cdiv(n, tile)
    n_split = 2 if nblk >= 2 else 1     # 2-way split of the reduction (megacore on v7x)
    spc = pl.cdiv(nblk, n_split)        # steps per core
    # First (unclamped) global block whose columns may be invalid (tail / padded).
    mask_from = nblk - 1 if (n % tile) else nblk
    if mask_from >= n_split * spc:
        mask_from = None
    last = nblk - 1

    def x_map(c, i, spc=spc, last=last):
        # Clamp padded steps in-bounds; their data is fully masked in-kernel.
        return (0, jnp.minimum(c * spc + i, last))

    x_spec = pl.BlockSpec((c_in, tile), x_map)
    w_spec = pl.BlockSpec(w_stk.shape, lambda c, i: (0, 0, 0))
    s_spec = pl.BlockSpec((None, cout2, 1), lambda c, i: (c, 0, 0))

    s, ss = pl.pallas_call(
        functools.partial(_stats_kernel, n, tile, spc, mask_from),
        out_shape=[jax.ShapeDtypeStruct((n_split, cout2, 1), jnp.float32)] * 2,
        grid=(n_split, spc),
        in_specs=[x_spec, x_spec, w_spec],
        out_specs=[s_spec, s_spec],
        compiler_params=pltpu.CompilerParams(
            dimension_semantics=("parallel", "arbitrary"),
            vmem_limit_bytes=_VMEM_LIMIT),
    )(xr2d, xi2d, w_stk)
    return s.sum(axis=0), ss.sum(axis=0)            # (2*Cout, 1) each


# ---------------------------------------------------------------------------
# Pass 2: conv (BN scale pre-folded into the weights) + shift + ReLU, streamed
# tile-by-tile with lane-dense output blocks; grid axis is "parallel".
# ---------------------------------------------------------------------------
def _apply_kernel(xr_ref, xi_ref, w_ref, shift_ref, o_ref):
    y = (jnp.dot(w_ref[0], xr_ref[...], preferred_element_type=jnp.float32)
         + jnp.dot(w_ref[1], xi_ref[...], preferred_element_type=jnp.float32))
    o_ref[...] = jnp.maximum(y + shift_ref[...], 0.0)


def _spectral_apply(xr2d, xi2d, w_stk, shift, tile):
    c_in, n = xr2d.shape
    cout2 = w_stk.shape[1]
    x_spec = pl.BlockSpec((c_in, tile), lambda i: (0, i))
    w_spec = pl.BlockSpec(w_stk.shape, lambda i: (0, 0, 0))
    c_spec = pl.BlockSpec((cout2, 1), lambda i: (0, 0))
    o_spec = pl.BlockSpec((cout2, tile), lambda i: (0, i))
    return pl.pallas_call(
        _apply_kernel,
        out_shape=jax.ShapeDtypeStruct((cout2, n), jnp.float32),
        grid=(pl.cdiv(n, tile),),
        in_specs=[x_spec, x_spec, w_spec, c_spec],
        out_specs=o_spec,
        compiler_params=pltpu.CompilerParams(
            dimension_semantics=("parallel",),
            vmem_limit_bytes=_VMEM_LIMIT),
    )(xr2d, xi2d, w_stk, shift)


# ---------------------------------------------------------------------------
# Forward pass (same semantics as the PyTorch FourierUnit forward).
# ---------------------------------------------------------------------------
def fourier_unit_forward(x, params, tile_n=2048):
    """x: (B, C, H, W) float32, NCHW — same as the PyTorch module."""
    b, c, h, w = x.shape
    dw, pw, gamma, beta = params
    cout = pw.shape[0] // 2

    # Fold depthwise 1x1 into the pointwise matrix (exact) and de-interleave the
    # *input* channel convention [c0_re, c0_im, ...] into two (2*Cout, Cin)
    # halves offline.  Output rows stay in the interleaved re/im order, so
    # gamma/beta apply directly and the result reshapes straight to (Cout, 2, ...).
    w_full = pw * dw[:, 0][None, :]                       # (2*Cout, 2*Cin)
    w_left = w_full[:, 0::2]                              # acts on Re(x)
    w_right = w_full[:, 1::2]                             # acts on Im(x)

    # TODO(synk): rfft2 / irfft2 have no Pallas TPU primitive; kept in plain JAX.
    # Channels go in front of batch before the FFT so each spectral plane
    # reshapes straight into a lane-dense (C, B*H*Wf) slab.
    xt = jnp.transpose(x, (1, 0, 2, 3))                   # (C, B, H, W)
    ffted = jnp.fft.rfft2(xt, norm="ortho")               # (C, B, H, Wf) complex64
    wf = ffted.shape[-1]
    n = b * h * wf
    # bf16 spectral planes: streamed from HBM twice (stats + apply), so this
    # halves the dominant read traffic; all accumulation stays in f32.
    xr2d = jnp.real(ffted).reshape(c, n).astype(jnp.bfloat16)
    xi2d = jnp.imag(ffted).reshape(c, n).astype(jnp.bfloat16)

    tile = _pick_tile(n, c, cout, tile_n)

    # Pass 1: training-mode BatchNorm batch statistics of the conv output.
    w_stats = jnp.stack([w_left, w_right], axis=0).astype(jnp.bfloat16)
    s, ss = _spectral_stats(xr2d, xi2d, w_stats, tile)
    inv_n = 1.0 / n
    mean = s * inv_n
    var = jnp.maximum(ss * inv_n - mean * mean, 0.0)      # biased, clamped (f32)
    scale = gamma * lax.rsqrt(var + BN_EPS)               # (2*Cout, 1)
    shift = beta - mean * scale

    # Pass 2: conv with BN scale folded into the weights, + shift + ReLU.
    w_apply = jnp.stack([scale * w_left, scale * w_right], axis=0).astype(jnp.bfloat16)
    y2d = _spectral_apply(xr2d, xi2d, w_apply, shift, tile)   # (2*Cout, n) f32

    y = y2d.reshape(cout, 2, b, h, wf)                    # interleaved rows -> (re, im)
    y_c = lax.complex(y[:, 0], y[:, 1])                   # (Cout, B, H, Wf)
    out = jnp.fft.irfft2(y_c, s=(h, w), norm="ortho")     # (Cout, B, H, W)
    return jnp.transpose(out, (1, 0, 2, 3))               # (B, Cout, H, W)


def init_params(in_channels, out_channels, key):
    cin2 = in_channels * 2
    cout2 = out_channels * 2
    k_dw, k_pw = jax.random.split(key)
    # depthwise Conv2d(cin2, cin2, k=1, groups=cin2, bias=False)
    dw = jax.random.normal(k_dw, (cin2, 1), dtype=jnp.float32) * 0.5
    # pointwise Conv2d(cin2, cout2, k=1, bias=False) -> together one 1x1 conv
    pw = jax.random.normal(k_pw, (cout2, cin2), dtype=jnp.float32) * (1.0 / cin2) ** 0.5
    # BatchNorm2d default init: gamma=1, beta=0 (interleaved output channel order)
    gamma = jnp.ones((cout2, 1), dtype=jnp.float32)
    beta = jnp.zeros((cout2, 1), dtype=jnp.float32)
    return dw, pw, gamma, beta


# Plain-JAX reference mirroring the PyTorch forward (interleaved channels,
# training-mode BN, all f32) for a numerical cross-check.
def _reference_forward(x, params):
    b, c, h, w = x.shape
    dw, pw, gamma, beta = params
    cout = pw.shape[0] // 2
    ffted = jnp.fft.rfft2(x, norm="ortho")
    wf = ffted.shape[-1]
    feat = jnp.stack([jnp.real(ffted), jnp.imag(ffted)], axis=2).reshape(b, 2 * c, h, wf)
    w_full = pw * dw[:, 0][None, :]
    y = jnp.einsum("oc,bchw->bohw", w_full, feat)
    mean = jnp.mean(y, axis=(0, 2, 3), keepdims=True)
    var = jnp.mean((y - mean) ** 2, axis=(0, 2, 3), keepdims=True)
    y = (y - mean) / jnp.sqrt(var + BN_EPS)
    y = y * gamma.reshape(1, -1, 1, 1) + beta.reshape(1, -1, 1, 1)
    y = jnp.maximum(y, 0.0)
    y = y.reshape(b, cout, 2, h, wf)
    y_c = lax.complex(y[:, :, 0], y[:, :, 1])
    return jnp.fft.irfft2(y_c, s=(h, w), norm="ortho")


if __name__ == "__main__":
    key = jax.random.PRNGKey(0)
    k_x, k_p = jax.random.split(key)

    # Small demo shapes; 2*Cout = 16 keeps the sublane axis vreg-aligned.
    B, C_IN, C_OUT, H, W = 2, 8, 8, 16, 16
    x = jax.random.normal(k_x, (B, C_IN, H, W), dtype=jnp.float32)
    params = init_params(C_IN, C_OUT, k_p)

    ref = _reference_forward(x, params)

    # Run 1: default tile (single full-width block per grid step).
    out = jax.block_until_ready(jax.jit(fourier_unit_forward)(x, params))
    assert out.shape == (B, C_OUT, H, W), out.shape
    assert bool(jnp.all(jnp.isfinite(out)))
    assert bool(jnp.allclose(out, ref, rtol=3e-2, atol=3e-2)), (
        float(jnp.max(jnp.abs(out - ref))))

    # Run 2: small tile — exercises multi-block streaming, the ragged-tail mask
    # and the 2-way core split / clamped duplicate step in the stats pass.
    fwd_small = jax.jit(functools.partial(fourier_unit_forward, tile_n=128))
    out2 = jax.block_until_ready(fwd_small(x, params))
    assert bool(jnp.all(jnp.isfinite(out2)))
    assert bool(jnp.allclose(out2, ref, rtol=3e-2, atol=3e-2)), (
        float(jnp.max(jnp.abs(out2 - ref))))

    print("KERNEL_OK")
</pallas_src>

<mosaic_0001>
module attributes {stable_mosaic.version = 11 : i64} {
  func.func @_stats_kernel(%arg0: i32, %arg1: i32, %arg2: memref<8x288xbf16, #tpu.memory_space<vmem>>, %arg3: memref<8x288xbf16, #tpu.memory_space<vmem>>, %arg4: memref<2x16x8xbf16, #tpu.memory_space<vmem>>, %arg5: memref<1x16x1xf32, #tpu.memory_space<vmem>>, %arg6: memref<1x16x1xf32, #tpu.memory_space<vmem>>) attributes {dimension_semantics = [#tpu.dimension_semantics<parallel>, #tpu.dimension_semantics<arbitrary>], iteration_bounds = array<i64: 1, 1>, scalar_prefetch = 0 : i64, scratch_operands = 0 : i64, tpu.core_type = #tpu.core_type<tc>, window_params = [{transform_indices = @transform_0, window_bounds = array<i64: 8, 288>}, {transform_indices = @transform_1, window_bounds = array<i64: 8, 288>}, {pipeline_mode = #tpu.pipeline_mode<synchronous>, transform_indices = @transform_2, window_bounds = array<i64: 2, 16, 8>}, {transform_indices = @transform_3, window_bounds = array<i64: 1, 16, 1>}, {transform_indices = @transform_4, window_bounds = array<i64: 1, 16, 1>}]} {
    %c0_i32 = arith.constant 0 : i32
    %0 = arith.cmpi eq, %arg1, %c0_i32 : i32
    %1 = arith.extui %0 : i1 to i32
    %c0_i32_0 = arith.constant 0 : i32
    %2 = arith.cmpi ne, %1, %c0_i32_0 : i32
    scf.if %2 {
      %cst_24 = arith.constant 0.000000e+00 : f32
      %29 = vector.broadcast %cst_24 : f32 to vector<16x1xf32>
      %c0_25 = arith.constant 0 : index
      %c0_26 = arith.constant 0 : index
      %c0_27 = arith.constant 0 : index
      %30 = vector.load %arg5[%c0_25, %c0_26, %c0_27] : memref<1x16x1xf32, #tpu.memory_space<vmem>>, vector<1x16x1xf32>
      %31 = vector.shape_cast %30 : vector<1x16x1xf32> to vector<16x1xf32>
      %32 = vector.shape_cast %29 : vector<16x1xf32> to vector<1x16x1xf32>
      tpu.vector_store %arg5[%c0_25, %c0_26, %c0_27], %32 {strides = array<i32>} : memref<1x16x1xf32, #tpu.memory_space<vmem>>, vector<1x16x1xf32>,
      %cst_28 = arith.constant 0.000000e+00 : f32
      %33 = vector.broadcast %cst_28 : f32 to vector<16x1xf32>
      %c0_29 = arith.constant 0 : index
      %c0_30 = arith.constant 0 : index
      %c0_31 = arith.constant 0 : index
      %34 = vector.load %arg6[%c0_29, %c0_30, %c0_31] : memref<1x16x1xf32, #tpu.memory_space<vmem>>, vector<1x16x1xf32>
      %35 = vector.shape_cast %34 : vector<1x16x1xf32> to vector<16x1xf32>
      %36 = vector.shape_cast %33 : vector<16x1xf32> to vector<1x16x1xf32>
      tpu.vector_store %arg6[%c0_29, %c0_30, %c0_31], %36 {strides = array<i32>} : memref<1x16x1xf32, #tpu.memory_space<vmem>>, vector<1x16x1xf32>,
    } else {
    }
    %c0 = arith.constant 0 : index
    %c0_1 = arith.constant 0 : index
    %c0_2 = arith.constant 0 : index
    %3 = vector.load %arg4[%c0, %c0_1, %c0_2] : memref<2x16x8xbf16, #tpu.memory_space<vmem>>, vector<1x16x8xbf16>
    %4 = vector.shape_cast %3 : vector<1x16x8xbf16> to vector<16x8xbf16>
    %c0_3 = arith.constant 0 : index
    %c0_4 = arith.constant 0 : index
    %5 = vector.load %arg2[%c0_3, %c0_4] : memref<8x288xbf16, #tpu.memory_space<vmem>>, vector<8x288xbf16>
    %cst = arith.constant dense<0.000000e+00> : vector<16x288xf32>
    %6 = tpu.matmul %4, %5, %cst {dimension_numbers = #tpu.dot_dimension_numbers<[1], [0], [0], [1], [0, 0, 1, 1], [], []>} : vector<16x8xbf16>, vector<8x288xbf16>, vector<16x288xf32> -> vector<16x288xf32>
    %c1 = arith.constant 1 : index
    %c0_5 = arith.constant 0 : index
    %c0_6 = arith.constant 0 : index
    %7 = vector.load %arg4[%c1, %c0_5, %c0_6] : memref<2x16x8xbf16, #tpu.memory_space<vmem>>, vector<1x16x8xbf16>
    %8 = vector.shape_cast %7 : vector<1x16x8xbf16> to vector<16x8xbf16>
    %c0_7 = arith.constant 0 : index
    %c0_8 = arith.constant 0 : index
    %9 = vector.load %arg3[%c0_7, %c0_8] : memref<8x288xbf16, #tpu.memory_space<vmem>>, vector<8x288xbf16>
    %cst_9 = arith.constant dense<0.000000e+00> : vector<16x288xf32>
    %10 = tpu.matmul %8, %9, %cst_9 {dimension_numbers = #tpu.dot_dimension_numbers<[1], [0], [0], [1], [0, 0, 1, 1], [], []>} : vector<16x8xbf16>, vector<8x288xbf16>, vector<16x288xf32> -> vector<16x288xf32>
    %11 = arith.addf %6, %10 : vector<16x288xf32>
    %c0_10 = arith.constant 0 : index
    %c0_11 = arith.constant 0 : index
    %c0_12 = arith.constant 0 : index
    %12 = vector.load %arg5[%c0_10, %c0_11, %c0_12] : memref<1x16x1xf32, #tpu.memory_space<vmem>>, vector<1x16x1xf32>
    %13 = vector.shape_cast %12 : vector<1x16x1xf32> to vector<16x1xf32>
    %cst_13 = arith.constant dense<0.000000e+00> : vector<16xf32>
    %14 = vector.multi_reduction <add>, %11, %cst_13 [1] : vector<16x288xf32> to vector<16xf32>
    %15 = vector.shape_cast %14 : vector<16xf32> to vector<16x1xf32>
    %16 = arith.addf %13, %15 : vector<16x1xf32>
    %c0_14 = arith.constant 0 : index
    %c0_15 = arith.constant 0 : index
    %c0_16 = arith.constant 0 : index
    %17 = vector.load %arg5[%c0_14, %c0_15, %c0_16] : memref<1x16x1xf32, #tpu.memory_space<vmem>>, vector<1x16x1xf32>
    %18 = vector.shape_cast %17 : vector<1x16x1xf32> to vector<16x1xf32>
    %19 = vector.shape_cast %16 : vector<16x1xf32> to vector<1x16x1xf32>
    tpu.vector_store %arg5[%c0_14, %c0_15, %c0_16], %19 {strides = array<i32>} : memref<1x16x1xf32, #tpu.memory_space<vmem>>, vector<1x16x1xf32>,
    %c0_17 = arith.constant 0 : index
    %c0_18 = arith.constant 0 : index
    %c0_19 = arith.constant 0 : index
    %20 = vector.load %arg6[%c0_17, %c0_18, %c0_19] : memref<1x16x1xf32, #tpu.memory_space<vmem>>, vector<1x16x1xf32>
    %21 = vector.shape_cast %20 : vector<1x16x1xf32> to vector<16x1xf32>
    %22 = arith.mulf %11, %11 : vector<16x288xf32>
    %cst_20 = arith.constant dense<0.000000e+00> : vector<16xf32>
    %23 = vector.multi_reduction <add>, %22, %cst_20 [1] : vector<16x288xf32> to vector<16xf32>
    %24 = vector.shape_cast %23 : vector<16xf32> to vector<16x1xf32>
    %25 = arith.addf %21, %24 : vector<16x1xf32>
    %c0_21 = arith.constant 0 : index
    %c0_22 = arith.constant 0 : index
    %c0_23 = arith.constant 0 : index
    %26 = vector.load %arg6[%c0_21, %c0_22, %c0_23] : memref<1x16x1xf32, #tpu.memory_space<vmem>>, vector<1x16x1xf32>
    %27 = vector.shape_cast %26 : vector<1x16x1xf32> to vector<16x1xf32>
    %28 = vector.shape_cast %25 : vector<16x1xf32> to vector<1x16x1xf32>
    tpu.vector_store %arg6[%c0_21, %c0_22, %c0_23], %28 {strides = array<i32>} : memref<1x16x1xf32, #tpu.memory_space<vmem>>, vector<1x16x1xf32>,
    return
  }
  func.func @transform_0(%arg0: i32, %arg1: i32) -> (i32, i32) {
    %c1_i32 = arith.constant 1 : i32
    %0 = arith.muli %arg0, %c1_i32 : i32
    %1 = arith.addi %0, %arg1 : i32
    %c0_i32 = arith.constant 0 : i32
    %2 = arith.minsi %1, %c0_i32 : i32
    %c0_i32_0 = arith.constant 0 : i32
    %c0_i32_1 = arith.constant 0 : i32
    return %c0_i32_0, %2 : i32, i32
  }
  func.func @transform_1(%arg0: i32, %arg1: i32) -> (i32, i32) {
    %c1_i32 = arith.constant 1 : i32
    %0 = arith.muli %arg0, %c1_i32 : i32
    %1 = arith.addi %0, %arg1 : i32
    %c0_i32 = arith.constant 0 : i32
    %2 = arith.minsi %1, %c0_i32 : i32
    %c0_i32_0 = arith.constant 0 : i32
    %c0_i32_1 = arith.constant 0 : i32
    return %c0_i32_0, %2 : i32, i32
  }
  func.func @transform_2(%arg0: i32, %arg1: i32) -> (i32, i32, i32) {
    %c0_i32 = arith.constant 0 : i32
    %c0_i32_0 = arith.constant 0 : i32
    %c0_i32_1 = arith.constant 0 : i32
    %c0_i32_2 = arith.constant 0 : i32
    return %c0_i32, %c0_i32_0, %c0_i32_1 : i32, i32, i32
  }
  func.func @transform_3(%arg0: i32, %arg1: i32) -> (i32, i32, i32) {
    %c0_i32 = arith.constant 0 : i32
    %c0_i32_0 = arith.constant 0 : i32
    %c0_i32_1 = arith.constant 0 : i32
    return %arg0, %c0_i32, %c0_i32_0 : i32, i32, i32
  }
  func.func @transform_4(%arg0: i32, %arg1: i32) -> (i32, i32, i32) {
    %c0_i32 = arith.constant 0 : i32
    %c0_i32_0 = arith.constant 0 : i32
    %c0_i32_1 = arith.constant 0 : i32
    return %arg0, %c0_i32, %c0_i32_0 : i32, i32, i32
  }
}

module attributes {stable_mosaic.version = 11 : i64} {
  func.func @_apply_kernel(%arg0: i32, %arg1: memref<8x288xbf16, #tpu.memory_space<vmem>>, %arg2: memref<8x288xbf16, #tpu.memory_space<vmem>>, %arg3: memref<2x16x8xbf16, #tpu.memory_space<vmem>>, %arg4: memref<16x1xf32, #tpu.memory_space<vmem>>, %arg5: memref<16x288xf32, #tpu.memory_space<vmem>>) attributes {dimension_semantics = [#tpu.dimension_semantics<parallel>], iteration_bounds = array<i64: 1>, scalar_prefetch = 0 : i64, scratch_operands = 0 : i64, tpu.core_type = #tpu.core_type<tc>, window_params = [{transform_indices = @transform_0, window_bounds = array<i64: 8, 288>}, {transform_indices = @transform_1, window_bounds = array<i64: 8, 288>}, {pipeline_mode = #tpu.pipeline_mode<synchronous>, transform_indices = @transform_2, window_bounds = array<i64: 2, 16, 8>}, {pipeline_mode = #tpu.pipeline_mode<synchronous>, transform_indices = @transform_3, window_bounds = array<i64: 16, 1>}, {transform_indices = @transform_4, window_bounds = array<i64: 16, 288>}]} {
    %c0 = arith.constant 0 : index
    %c0_0 = arith.constant 0 : index
    %c0_1 = arith.constant 0 : index
    %0 = vector.load %arg3[%c0, %c0_0, %c0_1] : memref<2x16x8xbf16, #tpu.memory_space<vmem>>, vector<1x16x8xbf16>
    %1 = vector.shape_cast %0 : vector<1x16x8xbf16> to vector<16x8xbf16>
    %c0_2 = arith.constant 0 : index
    %c0_3 = arith.constant 0 : index
    %2 = vector.load %arg1[%c0_2, %c0_3] : memref<8x288xbf16, #tpu.memory_space<vmem>>, vector<8x288xbf16>
    %cst = arith.constant dense<0.000000e+00> : vector<16x288xf32>
    %3 = tpu.matmul %1, %2, %cst {dimension_numbers = #tpu.dot_dimension_numbers<[1], [0], [0], [1], [0, 0, 1, 1], [], []>} : vector<16x8xbf16>, vector<8x288xbf16>, vector<16x288xf32> -> vector<16x288xf32>
    %c1 = arith.constant 1 : index
    %c0_4 = arith.constant 0 : index
    %c0_5 = arith.constant 0 : index
    %4 = vector.load %arg3[%c1, %c0_4, %c0_5] : memref<2x16x8xbf16, #tpu.memory_space<vmem>>, vector<1x16x8xbf16>
    %5 = vector.shape_cast %4 : vector<1x16x8xbf16> to vector<16x8xbf16>
    %c0_6 = arith.constant 0 : index
    %c0_7 = arith.constant 0 : index
    %6 = vector.load %arg2[%c0_6, %c0_7] : memref<8x288xbf16, #tpu.memory_space<vmem>>, vector<8x288xbf16>
    %cst_8 = arith.constant dense<0.000000e+00> : vector<16x288xf32>
    %7 = tpu.matmul %5, %6, %cst_8 {dimension_numbers = #tpu.dot_dimension_numbers<[1], [0], [0], [1], [0, 0, 1, 1], [], []>} : vector<16x8xbf16>, vector<8x288xbf16>, vector<16x288xf32> -> vector<16x288xf32>
    %8 = arith.addf %3, %7 : vector<16x288xf32>
    %c0_9 = arith.constant 0 : index
    %c0_10 = arith.constant 0 : index
    %9 = vector.load %arg4[%c0_9, %c0_10] : memref<16x1xf32, #tpu.memory_space<vmem>>, vector<16x1xf32>
    %10 = vector.broadcast %9 : vector<16x1xf32> to vector<16x288xf32>
    %11 = arith.addf %8, %10 : vector<16x288xf32>
    %cst_11 = arith.constant 0.000000e+00 : f32
    %12 = vector.broadcast %cst_11 : f32 to vector<16x288xf32>
    %13 = arith.maximumf %11, %12 : vector<16x288xf32>
    %c0_12 = arith.constant 0 : index
    %c0_13 = arith.constant 0 : index
    %14 = vector.load %arg5[%c0_12, %c0_13] : memref<16x288xf32, #tpu.memory_space<vmem>>, vector<16x288xf32>
    tpu.vector_store %arg5[%c0_12, %c0_13], %13 {strides = array<i32>} : memref<16x288xf32, #tpu.memory_space<vmem>>, vector<16x288xf32>,
    return
  }
  func.func @transform_0(%arg0: i32) -> (i32, i32) {
    %c0_i32 = arith.constant 0 : i32
    %c0_i32_0 = arith.constant 0 : i32
    return %c0_i32, %arg0 : i32, i32
  }
  func.func @transform_1(%arg0: i32) -> (i32, i32) {
    %c0_i32 = arith.constant 0 : i32
    %c0_i32_0 = arith.constant 0 : i32
    return %c0_i32, %arg0 : i32, i32
  }
  func.func @transform_2(%arg0: i32) -> (i32, i32, i32) {
    %c0_i32 = arith.constant 0 : i32
    %c0_i32_0 = arith.constant 0 : i32
    %c0_i32_1 = arith.constant 0 : i32
    %c0_i32_2 = arith.constant 0 : i32
    return %c0_i32, %c0_i32_0, %c0_i32_1 : i32, i32, i32
  }
  func.func @transform_3(%arg0: i32) -> (i32, i32) {
    %c0_i32 = arith.constant 0 : i32
    %c0_i32_0 = arith.constant 0 : i32
    %c0_i32_1 = arith.constant 0 : i32
    return %c0_i32, %c0_i32_0 : i32, i32
  }
  func.func @transform_4(%arg0: i32) -> (i32, i32) {
    %c0_i32 = arith.constant 0 : i32
    %c0_i32_0 = arith.constant 0 : i32
    return %c0_i32, %arg0 : i32, i32
  }
}

</mosaic_0001>

<llo_original>
// kernel: fourier_unit_forward.3
$region0: #{fourier_unit_forward.3}
  #allocation0 [shape = 'u32[]', space=smem, size = 0x4, offset = 0x4, fixed_abs, tag = 'smem constant byte address 0x4 - core index']
  #allocation1 [shape = 'u32[144,128]{1,0:T(1,128)}', space=vmem, size = 0x12000, scoped, tag = 'internal scratch']
  %s0 = inlined_call_operand.vmem [shape: bf16[8,288], index: 0, kind: input, shape index: {}]
  %s1 = inlined_call_operand.vmem [shape: bf16[8,288], index: 1, kind: input, shape index: {}]
  %s2 = inlined_call_operand.vmem [shape: bf16[2,16,8], index: 2, kind: input, shape index: {}]
  %s3 = inlined_call_operand.vmem [shape: f32[16,1], index: 3, kind: input, shape index: {}]
  %s4 = inlined_call_operand.vmem [shape: f32[16,288], index: 4, kind: output, shape index: {}]
  %s5 = sld [smem:[#allocation0]]
  $region26: #{fourier_unit_forward.3} parent=0
    _
  %s7 = ssub.s32 1, %s5
  %s8 = scalar_select 0, %s7, %s5
  // Predicated region
  $region2: #{fourier_unit_forward.3} parent=0 // pred_check
    _
  $region3: #{fourier_unit_forward.3} parent=0 // pred_check_branch
    %10 = sbr.rel (0) target = $region5
  $region4: #{fourier_unit_forward.3} parent=0 // pred_region
    _
  $region5: #{fourier_unit_forward.3} parent=0 // pred_fallthru
    _
  // Predicated region
  $region6: #{fourier_unit_forward.3} parent=0 // pred_check
    _
  $region7: #{fourier_unit_forward.3} parent=0 // pred_check_branch
    %12 = sbr.rel (0) target = $region9
  $region8: #{fourier_unit_forward.3} parent=0 // pred_region
    _
  $region9: #{fourier_unit_forward.3} parent=0 // pred_fallthru
    _
  // Predicated region
  $region10: #{fourier_unit_forward.3} parent=0 // pred_check
    _
  $region11: #{fourier_unit_forward.3} parent=0 // pred_check_branch
    %14 = sbr.rel (0) target = $region13
  $region12: #{fourier_unit_forward.3} parent=0 // pred_region
    _
  $region13: #{fourier_unit_forward.3} parent=0 // pred_fallthru
    _
  // Predicated region
  $region14: #{fourier_unit_forward.3} parent=0 // pred_check
    _
  $region15: #{fourier_unit_forward.3} parent=0 // pred_check_branch
    %16 = sbr.rel (0) target = $region17
  $region16: #{fourier_unit_forward.3} parent=0 // pred_region
    _
  $region17: #{fourier_unit_forward.3} parent=0 // pred_fallthru
    _
  %v18 = vld [vmem:[%s2] sm:$0xf]
  %v19 = vld [vmem:[%s2 + $0x4] sm:$0xf]
  %v20 = vld [vmem:[%s0] sm:$0xff]
  %v21 = vld [vmem:[%s0 + $0x8] sm:$0xf]
  %s22 = scalar_lea.vmem %s2, 8
  %v23 = vld [vmem:[%s22] sm:$0xf]
  %v24 = vld [vmem:[%s22 + $0x4] sm:$0xf]
  %v25 = vld [vmem:[%s1] sm:$0xff]
  %v26 = vld [vmem:[%s1 + $0x8] sm:$0xf]
  %v29 = vunpack.c.l.b16 %v23
  %v30 = vunpack.c.l.b16 %v24
  %v31 = vpack.c.b16 %v30, %v29
  %v34 = vunpack.c.l.b16 %v25
  %v35 = vunpack.c.h.b16 %v25
  %v36 = vunpack.c.l.b16 %v26
  %v37 = vpack.c.b16 %v34, %v34
  %v38 = vpack.c.b16 %v35, %v35
  %v39 = vpack.c.b16 %v36, %v36
  %vm40 = vcmask 64512
  %v42 = vsel %vm40, %v31, 0
  %vm44 = vcmask 1043456
  %v46 = vsel %vm44, %v37, 0
  %v49 = vsel %vm44, %v38, 0
  %v52 = vsel %vm44, %v39, 0
  %54 = vmatprep.subr.bf16.mxu0 %v49
  %55 = vmatpush1.bf16.msra.mxu0 %v46
  %56 = vmatprep.subr.bf16.mxu0 0
  %57 = vmatpush1.bf16.msra.mxu0 0
  %58 = vmatprep.subr.bf16.mxu0 0
  %59 = vmatpush1.bf16.msra.mxu0 0
  %60 = vmatprep.subr.bf16.mxu0 0
  %61 = vmatpush1.bf16.msra.mxu0 0
  %62 = vmatprep.subr.bf16.mxu0 0
  %63 = vmatpush1.bf16.msra.mxu0 0
  %64 = vmatprep.subr.bf16.mxu0 0
  %65 = vmatpush1.bf16.msra.mxu0 0
  %66 = vmatprep.subr.bf16.mxu0 0
  %67 = vmatpush1.bf16.msra.mxu0 0
  %68 = vmatprep.subr.bf16.mxu0 0
  %69 = vmatpush1.bf16.msra.mxu0 0
  %70 = vmatprep.subr.bf16.mxu0 0
  %71 = vmatpush1.bf16.msra.mxu0 0
  %72 = vmatprep.subr.bf16.mxu0 0
  %73 = vmatpush1.bf16.msra.mxu0 0
  %74 = vmatprep.subr.bf16.mxu0 0
  %75 = vmatpush1.bf16.msra.mxu0 0
  %76 = vmatprep.subr.bf16.mxu0 0
  %77 = vmatpush1.bf16.msra.mxu0 0
  %78 = vmatprep.subr.bf16.mxu0 0
  %79 = vmatpush1.bf16.msra.mxu0 0
  %80 = vmatprep.subr.bf16.mxu0 0
  %81 = vmatpush1.bf16.msra.mxu0 0
  %82 = vmatprep.subr.bf16.mxu0 0
  %83 = vmatpush1.bf16.msra.mxu0 0
  %84 = vmatprep.subr.bf16.mxu0 0
  %85 = vmatpush1.bf16.msra.mxu0 0
  %86 = vmatprep.mubr.bf16.mxu0 0
  %87 = vmatmul.mubr.bf16.gmra.mrb[0].mxu0 %v42
  %v88 = vpop.f32.mrb[0].mxu0
  %v89 = vadd.f32 0.0, %v88
  %v90 = vpop.f32.mrb[0].mxu0
  %v91 = vadd.f32 0.0, %v90
  %v92 = vpop.f32.mrb[0].mxu0
  %v93 = vadd.f32 0.0, %v92
  %v94 = vpop.f32.mrb[0].mxu0
  %v95 = vadd.f32 0.0, %v94
  %96 = vdwg.mxu0
  %97 = vmatprep.subr.bf16.mxu0 0
  %98 = vmatpush1.bf16.msra.mxu0 %v52
  %99 = vmatprep.subr.bf16.mxu0 0
  %100 = vmatpush1.bf16.msra.mxu0 0
  %101 = vmatprep.subr.bf16.mxu0 0
  %102 = vmatpush1.bf16.msra.mxu0 0
  %103 = vmatprep.subr.bf16.mxu0 0
  %104 = vmatpush1.bf16.msra.mxu0 0
  %105 = vmatprep.subr.bf16.mxu0 0
  %106 = vmatpush1.bf16.msra.mxu0 0
  %107 = vmatprep.subr.bf16.mxu0 0
  %108 = vmatpush1.bf16.msra.mxu0 0
  %109 = vmatprep.subr.bf16.mxu0 0
  %110 = vmatpush1.bf16.msra.mxu0 0
  %111 = vmatprep.subr.bf16.mxu0 0
  %112 = vmatpush1.bf16.msra.mxu0 0
  %113 = vmatprep.subr.bf16.mxu0 0
  %114 = vmatpush1.bf16.msra.mxu0 0
  %115 = vmatprep.subr.bf16.mxu0 0
  %116 = vmatpush1.bf16.msra.mxu0 0
  %117 = vmatprep.subr.bf16.mxu0 0
  %118 = vmatpush1.bf16.msra.mxu0 0
  %119 = vmatprep.subr.bf16.mxu0 0
  %120 = vmatpush1.bf16.msra.mxu0 0
  %121 = vmatprep.subr.bf16.mxu0 0
  %122 = vmatpush1.bf16.msra.mxu0 0
  %123 = vmatprep.subr.bf16.mxu0 0
  %124 = vmatpush1.bf16.msra.mxu0 0
  %125 = vmatprep.subr.bf16.mxu0 0
  %126 = vmatpush1.bf16.msra.mxu0 0
  %127 = vmatprep.subr.bf16.mxu0 0
  %128 = vmatpush1.bf16.msra.mxu0 0
  %129 = vmatprep.mubr.bf16.mxu0 0
  %130 = vmatmul.mubr.bf16.gmra.mrb[0].mxu0 %v42
  %v131 = vpop.f32.mrb[0].mxu0
  %v132 = vadd.f32 0.0, %v131
  %v133 = vpop.f32.mrb[0].mxu0
  %v134 = vpop.f32.mrb[0].mxu0
  %v135 = vadd.f32 0.0, %v134
  %v136 = vpop.f32.mrb[0].mxu0
  %137 = vdwg.mxu0
  %v140 = vunpack.c.l.b16 %v18
  %v141 = vunpack.c.l.b16 %v19
  %v142 = vpack.c.b16 %v141, %v140
  %v145 = vunpack.c.l.b16 %v20
  %v146 = vunpack.c.h.b16 %v20
  %v147 = vunpack.c.l.b16 %v21
  %v148 = vpack.c.b16 %v145, %v145
  %v149 = vpack.c.b16 %v146, %v146
  %v150 = vpack.c.b16 %v147, %v147
  %v152 = vsel %vm40, %v142, 0
  %v155 = vsel %vm44, %v148, 0
  %v158 = vsel %vm44, %v149, 0
  %v161 = vsel %vm44, %v150, 0
  %163 = vmatprep.subr.bf16.mxu0 %v158
  %164 = vmatpush1.bf16.msra.mxu0 %v155
  %165 = vmatprep.subr.bf16.mxu0 0
  %166 = vmatpush1.bf16.msra.mxu0 0
  %167 = vmatprep.subr.bf16.mxu0 0
  %168 = vmatpush1.bf16.msra.mxu0 0
  %169 = vmatprep.subr.bf16.mxu0 0
  %170 = vmatpush1.bf16.msra.mxu0 0
  %171 = vmatprep.subr.bf16.mxu0 0
  %172 = vmatpush1.bf16.msra.mxu0 0
  %173 = vmatprep.subr.bf16.mxu0 0
  %174 = vmatpush1.bf16.msra.mxu0 0
  %175 = vmatprep.subr.bf16.mxu0 0
  %176 = vmatpush1.bf16.msra.mxu0 0
  %177 = vmatprep.subr.bf16.mxu0 0
  %178 = vmatpush1.bf16.msra.mxu0 0
  %179 = vmatprep.subr.bf16.mxu0 0
  %180 = vmatpush1.bf16.msra.mxu0 0
  %181 = vmatprep.subr.bf16.mxu0 0
  %182 = vmatpush1.bf16.msra.mxu0 0
  %183 = vmatprep.subr.bf16.mxu0 0
  %184 = vmatpush1.bf16.msra.mxu0 0
  %185 = vmatprep.subr.bf16.mxu0 0
  %186 = vmatpush1.bf16.msra.mxu0 0
  %187 = vmatprep.subr.bf16.mxu0 0
  %188 = vmatpush1.bf16.msra.mxu0 0
  %189 = vmatprep.subr.bf16.mxu0 0
  %190 = vmatpush1.bf16.msra.mxu0 0
  %191 = vmatprep.subr.bf16.mxu0 0
  %192 = vmatpush1.bf16.msra.mxu0 0
  %193 = vmatprep.subr.bf16.mxu0 0
  %194 = vmatpush1.bf16.msra.mxu0 0
  %195 = vmatprep.mubr.bf16.mxu0 0
  %196 = vmatmul.mubr.bf16.gmra.mrb[0].mxu0 %v152
  %v197 = vpop.f32.mrb[0].mxu0
  %v198 = vadd.f32 %v89, %v197
  %v199 = vpop.f32.mrb[0].mxu0
  %v200 = vadd.f32 %v91, %v199
  %v201 = vpop.f32.mrb[0].mxu0
  %v202 = vadd.f32 %v93, %v201
  %v203 = vpop.f32.mrb[0].mxu0
  %v204 = vadd.f32 %v95, %v203
  %205 = vdwg.mxu0
  %206 = vmatprep.subr.bf16.mxu0 0
  %207 = vmatpush1.bf16.msra.mxu0 %v161
  %208 = vmatprep.subr.bf16.mxu0 0
  %209 = vmatpush1.bf16.msra.mxu0 0
  %210 = vmatprep.subr.bf16.mxu0 0
  %211 = vmatpush1.bf16.msra.mxu0 0
  %212 = vmatprep.subr.bf16.mxu0 0
  %213 = vmatpush1.bf16.msra.mxu0 0
  %214 = vmatprep.subr.bf16.mxu0 0
  %215 = vmatpush1.bf16.msra.mxu0 0
  %216 = vmatprep.subr.bf16.mxu0 0
  %217 = vmatpush1.bf16.msra.mxu0 0
  %218 = vmatprep.subr.bf16.mxu0 0
  %219 = vmatpush1.bf16.msra.mxu0 0
  %220 = vmatprep.subr.bf16.mxu0 0
  %221 = vmatpush1.bf16.msra.mxu0 0
  %222 = vmatprep.subr.bf16.mxu0 0
  %223 = vmatpush1.bf16.msra.mxu0 0
  %224 = vmatprep.subr.bf16.mxu0 0
  %225 = vmatpush1.bf16.msra.mxu0 0
  %226 = vmatprep.subr.bf16.mxu0 0
  %227 = vmatpush1.bf16.msra.mxu0 0
  %228 = vmatprep.subr.bf16.mxu0 0
  %229 = vmatpush1.bf16.msra.mxu0 0
  %230 = vmatprep.subr.bf16.mxu0 0
  %231 = vmatpush1.bf16.msra.mxu0 0
  %232 = vmatprep.subr.bf16.mxu0 0
  %233 = vmatpush1.bf16.msra.mxu0 0
  %234 = vmatprep.subr.bf16.mxu0 0
  %235 = vmatpush1.bf16.msra.mxu0 0
  %236 = vmatprep.subr.bf16.mxu0 0
  %237 = vmatpush1.bf16.msra.mxu0 0
  %238 = vmatprep.mubr.bf16.mxu0 0
  %239 = vmatmul.mubr.bf16.gmra.mrb[0].mxu0 %v152
  %v240 = vpop.f32.mrb[0].mxu0
  %v241 = vadd.f32 %v132, %v240
  %v242 = vpop.f32.mrb[0].mxu0
  %v243 = vpop.f32.mrb[0].mxu0
  %v244 = vadd.f32 %v135, %v243
  %v245 = vpop.f32.mrb[0].mxu0
  %246 = vdwg.mxu0
  %v247 = vld [vmem:[%s3] sm:$0xff]
  %v248 = vld [vmem:[%s3 + $0x8] sm:$0xff]
  %250 = vset.pattern.permute.xlu0 0
  %251 = vperm.xlu0 %250, %v247
  %v252 = vpop.permute.xlu0 %251
  %255 = vset.pattern.permute.xlu0 0
  %256 = vperm.xlu0 %255, %v248
  %v257 = vpop.permute.xlu0 %256
  %v259 = vadd.f32 %v198, %v252
  %v260 = vadd.f32 %v200, %v252
  %v261 = vadd.f32 %v241, %v252
  %v262 = vadd.f32 %v202, %v257
  %v263 = vadd.f32 %v204, %v257
  %v264 = vadd.f32 %v244, %v257
  %v265 = vmax.f32 %v259, 0.0
  %v266 = vmax.f32 %v260, 0.0
  %v267 = vmax.f32 %v261, 0.0
  %v268 = vmax.f32 %v262, 0.0
  %v269 = vmax.f32 %v263, 0.0
  %v270 = vmax.f32 %v264, 0.0
  %271 = vst [vmem:[%s4] sm:$0xff] %v265
  %272 = vst [vmem:[%s4 + $0x8] sm:$0xff] %v266
  %vm273 = vcmask 261120
  %274 = vst.msk [vmem:[%s4 + $0x10] sm:$0xff] %vm273, %v267
  %275 = vst [vmem:[%s4 + $0x18] sm:$0xff] %v268
  %276 = vst [vmem:[%s4 + $0x20] sm:$0xff] %v269
  %277 = vst.msk [vmem:[%s4 + $0x28] sm:$0xff] %vm273, %v270
  // Predicated region
  $region18: #{fourier_unit_forward.3} parent=0 // pred_check
    _
  $region19: #{fourier_unit_forward.3} parent=0 // pred_check_branch
    %279 = sbr.rel (0) target = $region21
  $region20: #{fourier_unit_forward.3} parent=0 // pred_region
    _
  $region21: #{fourier_unit_forward.3} parent=0 // pred_fallthru
    _
  // Predicated region
  $region22: #{fourier_unit_forward.3} parent=0 // pred_check
    _
  $region23: #{fourier_unit_forward.3} parent=0 // pred_check_branch
    %281 = sbr.rel (0) target = $region25
  $region24: #{fourier_unit_forward.3} parent=0 // pred_region
    _
  $region25: #{fourier_unit_forward.3} parent=0 // pred_fallthru
    _

// kernel: fourier_unit_forward.2
$region0: #{fourier_unit_forward.2}
  #allocation0 [shape = 'u32[]', space=smem, size = 0x4, offset = 0x4, fixed_abs, tag = 'smem constant byte address 0x4 - core index']
  #allocation1 [shape = 'u32[144,128]{1,0:T(1,128)}', space=vmem, size = 0x12000, scoped, tag = 'internal scratch']
  %s0 = inlined_call_operand.vmem [shape: bf16[8,288], index: 0, kind: input, shape index: {}]
  %s1 = inlined_call_operand.vmem [shape: bf16[8,288], index: 1, kind: input, shape index: {}]
  %s2 = inlined_call_operand.vmem [shape: bf16[2,16,8], index: 2, kind: input, shape index: {}]
  %s3 = inlined_call_operand.vmem [shape: f32[1,16,1], index: 3, kind: output, shape index: {0}]
  %s4 = inlined_call_operand.vmem [shape: f32[1,16,1], index: 4, kind: output, shape index: {1}]
  %5 = xla_tuple %s3, %s4
  %s6 = sld [smem:[#allocation0]]
  $region34: #{fourier_unit_forward.2} parent=0
    _
  %s8 = ssub.s32 1, %s6
  %s9 = scalar_select 0, %s8, %s6
  // Predicated region
  $region2: #{fourier_unit_forward.2} parent=0 // pred_check
    _
  $region3: #{fourier_unit_forward.2} parent=0 // pred_check_branch
    %11 = sbr.rel (0) target = $region5
  $region4: #{fourier_unit_forward.2} parent=0 // pred_region
    %s12 = sadd.s32 0, 0
    %p13 = scmp.lt.s32.totalorder %s12, 0
    %s14 = scalar_select %p13, %s12, 0
    %s15 = smul.u32 3, %s14
    %p16 = scmp.lt.s32.totalorder %s15, 2
    %s17 = scalar_select %p16, %s15, 2
    %s18 = smul.addr %s17, 4
    %s19 = scalar_lea.vmem %s0, %s18
    %s20 = sadd.s32 0, 0
    %p21 = scmp.lt.s32.totalorder %s20, 0
    %s22 = scalar_select %p21, %s20, 0
    %s23 = smul.u32 3, %s22
  $region5: #{fourier_unit_forward.2} parent=0 // pred_fallthru
    _
  // Predicated region
  $region6: #{fourier_unit_forward.2} parent=0 // pred_check
    _
  $region7: #{fourier_unit_forward.2} parent=0 // pred_check_branch
    %25 = sbr.rel (0) target = $region9
  $region8: #{fourier_unit_forward.2} parent=0 // pred_region
    %s26 = sadd.s32 0, 0
    %p27 = scmp.lt.s32.totalorder %s26, 0
    %s28 = scalar_select %p27, %s26, 0
    %s29 = smul.u32 3, %s28
    %p30 = scmp.lt.s32.totalorder %s29, 2
    %s31 = scalar_select %p30, %s29, 2
    %s32 = smul.addr %s31, 4
    %s33 = scalar_lea.vmem %s1, %s32
    %s34 = sadd.s32 0, 0
    %p35 = scmp.lt.s32.totalorder %s34, 0
    %s36 = scalar_select %p35, %s34, 0
    %s37 = smul.u32 3, %s36
  $region9: #{fourier_unit_forward.2} parent=0 // pred_fallthru
    _
  // Predicated region
  $region10: #{fourier_unit_forward.2} parent=0 // pred_check
    _
  $region11: #{fourier_unit_forward.2} parent=0 // pred_check_branch
    %39 = sbr.rel (0) target = $region13
  $region12: #{fourier_unit_forward.2} parent=0 // pred_region
    _
  $region13: #{fourier_unit_forward.2} parent=0 // pred_fallthru
    _
  %s40 = sadd.s32 0, 0
  %p41 = scmp.lt.s32.totalorder %s40, 0
  %s42 = scalar_select %p41, %s40, 0
  %s43 = smul.u32 3, %s42
  %p44 = scmp.lt.s32.totalorder %s43, 2
  %s45 = scalar_select %p44, %s43, 2
  %s46 = smul.addr %s45, 4
  %s47 = scalar_lea.vmem %s0, %s46
  %s48 = sadd.s32 0, 0
  %p49 = scmp.lt.s32.totalorder %s48, 0
  %s50 = scalar_select %p49, %s48, 0
  %s51 = smul.u32 3, %s50
  %p52 = scmp.lt.s32.totalorder %s51, 2
  %s53 = scalar_select %p52, %s51, 2
  %s54 = smul.addr %s53, 4
  %s55 = scalar_lea.vmem %s1, %s54
  %s56 = sadd.s32 0, 0
  %p57 = scmp.lt.s32.totalorder %s56, 0
  %s58 = scalar_select %p57, %s56, 0
  %s59 = smul.u32 3, %s58
  %p60 = scmp.lt.s32.totalorder %s59, 2
  %s61 = scalar_select %p60, %s59, 2
  %s62 = smul.addr %s61, 4
  %s63 = scalar_lea.vmem %s0, %s62
  %s64 = sadd.s32 0, 0
  %p65 = scmp.lt.s32.totalorder %s64, 0
  %s66 = scalar_select %p65, %s64, 0
  %s67 = smul.u32 3, %s66
  %s68 = sadd.s32 0, 0
  %p69 = scmp.lt.s32.totalorder %s68, 0
  %s70 = scalar_select %p69, %s68, 0
  %s71 = smul.u32 3, %s70
  %p72 = scmp.lt.s32.totalorder %s71, 2
  %s73 = scalar_select %p72, %s71, 2
  %s74 = smul.addr %s73, 4
  %s75 = scalar_lea.vmem %s1, %s74
  %s76 = sadd.s32 0, 0
  %p77 = scmp.lt.s32.totalorder %s76, 0
  %s78 = scalar_select %p77, %s76, 0
  %s79 = smul.u32 3, %s78
  %p81 = scmp.eq.s32.totalorder 0, 0
  // Predicated region
  $region14: #{fourier_unit_forward.2} parent=0 // pred_check
    %p82 = pneg %p81
  $region15: #{fourier_unit_forward.2} parent=0 // pred_check_branch
    %84 = sbr.rel (%p82) target = $region17
  $region16: #{fourier_unit_forward.2} parent=0 // pred_region
    %vm85 = vcmask 7168
    %86 = vst.msk [vmem:[%s3] sm:$0xff] %vm85, 0.0
    %87 = vst.msk [vmem:[%s3 + $0x8] sm:$0xff] %vm85, 0.0
    %88 = vst.msk [vmem:[%s4] sm:$0xff] %vm85, 0.0
    %89 = vst.msk [vmem:[%s4 + $0x8] sm:$0xff] %vm85, 0.0
  $region17: #{fourier_unit_forward.2} parent=0 // pred_fallthru
    _
  %v90 = vld [vmem:[%s2] sm:$0xf]
  %v91 = vld [vmem:[%s2 + $0x4] sm:$0xf]
  %v92 = vld [vmem:[%s63] sm:$0xff]
  %v93 = vld [vmem:[%s63 + $0x8] sm:$0xf]
  %s94 = scalar_lea.vmem %s2, 8
  %v95 = vld [vmem:[%s94] sm:$0xf]
  %v96 = vld [vmem:[%s94 + $0x4] sm:$0xf]
  %v97 = vld [vmem:[%s75] sm:$0xff]
  %v98 = vld [vmem:[%s75 + $0x8] sm:$0xf]
  %v101 = vunpack.c.l.b16 %v95
  %v102 = vunpack.c.l.b16 %v96
  %v103 = vpack.c.b16 %v102, %v101
  %v106 = vunpack.c.l.b16 %v97
  %v107 = vunpack.c.h.b16 %v97
  %v108 = vunpack.c.l.b16 %v98
  %v109 = vpack.c.b16 %v106, %v106
  %v110 = vpack.c.b16 %v107, %v107
  %v111 = vpack.c.b16 %v108, %v108
  %vm112 = vcmask 64512
  %v114 = vsel %vm112, %v103, 0
  %vm116 = vcmask 1043456
  %v118 = vsel %vm116, %v109, 0
  %v121 = vsel %vm116, %v110, 0
  %v124 = vsel %vm116, %v111, 0
  %126 = vmatprep.subr.bf16.mxu0 %v121
  %127 = vmatpush1.bf16.msra.mxu0 %v118
  %128 = vmatprep.subr.bf16.mxu0 0
  %129 = vmatpush1.bf16.msra.mxu0 0
  %130 = vmatprep.subr.bf16.mxu0 0
  %131 = vmatpush1.bf16.msra.mxu0 0
  %132 = vmatprep.subr.bf16.mxu0 0
  %133 = vmatpush1.bf16.msra.mxu0 0
  %134 = vmatprep.subr.bf16.mxu0 0
  %135 = vmatpush1.bf16.msra.mxu0 0
  %136 = vmatprep.subr.bf16.mxu0 0
  %137 = vmatpush1.bf16.msra.mxu0 0
  %138 = vmatprep.subr.bf16.mxu0 0
  %139 = vmatpush1.bf16.msra.mxu0 0
  %140 = vmatprep.subr.bf16.mxu0 0
  %141 = vmatpush1.bf16.msra.mxu0 0
  %142 = vmatprep.subr.bf16.mxu0 0
  %143 = vmatpush1.bf16.msra.mxu0 0
  %144 = vmatprep.subr.bf16.mxu0 0
  %145 = vmatpush1.bf16.msra.mxu0 0
  %146 = vmatprep.subr.bf16.mxu0 0
  %147 = vmatpush1.bf16.msra.mxu0 0
  %148 = vmatprep.subr.bf16.mxu0 0
  %149 = vmatpush1.bf16.msra.mxu0 0
  %150 = vmatprep.subr.bf16.mxu0 0
  %151 = vmatpush1.bf16.msra.mxu0 0
  %152 = vmatprep.subr.bf16.mxu0 0
  %153 = vmatpush1.bf16.msra.mxu0 0
  %154 = vmatprep.subr.bf16.mxu0 0
  %155 = vmatpush1.bf16.msra.mxu0 0
  %156 = vmatprep.subr.bf16.mxu0 0
  %157 = vmatpush1.bf16.msra.mxu0 0
  %158 = vmatprep.mubr.bf16.mxu0 0
  %159 = vmatmul.mubr.bf16.gmra.mrb[0].mxu0 %v114
  %v160 = vpop.f32.mrb[0].mxu0
  %v161 = vadd.f32 0.0, %v160
  %v162 = vpop.f32.mrb[0].mxu0
  %v163 = vadd.f32 0.0, %v162
  %v164 = vpop.f32.mrb[0].mxu0
  %v165 = vadd.f32 0.0, %v164
  %v166 = vpop.f32.mrb[0].mxu0
  %v167 = vadd.f32 0.0, %v166
  %168 = vdwg.mxu0
  %169 = vmatprep.subr.bf16.mxu0 0
  %170 = vmatpush1.bf16.msra.mxu0 %v124
  %171 = vmatprep.subr.bf16.mxu0 0
  %172 = vmatpush1.bf16.msra.mxu0 0
  %173 = vmatprep.subr.bf16.mxu0 0
  %174 = vmatpush1.bf16.msra.mxu0 0
  %175 = vmatprep.subr.bf16.mxu0 0
  %176 = vmatpush1.bf16.msra.mxu0 0
  %177 = vmatprep.subr.bf16.mxu0 0
  %178 = vmatpush1.bf16.msra.mxu0 0
  %179 = vmatprep.subr.bf16.mxu0 0
  %180 = vmatpush1.bf16.msra.mxu0 0
  %181 = vmatprep.subr.bf16.mxu0 0
  %182 = vmatpush1.bf16.msra.mxu0 0
  %183 = vmatprep.subr.bf16.mxu0 0
  %184 = vmatpush1.bf16.msra.mxu0 0
  %185 = vmatprep.subr.bf16.mxu0 0
  %186 = vmatpush1.bf16.msra.mxu0 0
  %187 = vmatprep.subr.bf16.mxu0 0
  %188 = vmatpush1.bf16.msra.mxu0 0
  %189 = vmatprep.subr.bf16.mxu0 0
  %190 = vmatpush1.bf16.msra.mxu0 0
  %191 = vmatprep.subr.bf16.mxu0 0
  %192 = vmatpush1.bf16.msra.mxu0 0
  %193 = vmatprep.subr.bf16.mxu0 0
  %194 = vmatpush1.bf16.msra.mxu0 0
  %195 = vmatprep.subr.bf16.mxu0 0
  %196 = vmatpush1.bf16.msra.mxu0 0
  %197 = vmatprep.subr.bf16.mxu0 0
  %198 = vmatpush1.bf16.msra.mxu0 0
  %199 = vmatprep.subr.bf16.mxu0 0
  %200 = vmatpush1.bf16.msra.mxu0 0
  %201 = vmatprep.mubr.bf16.mxu0 0
  %202 = vmatmul.mubr.bf16.gmra.mrb[0].mxu0 %v114
  %v203 = vpop.f32.mrb[0].mxu0
  %v204 = vadd.f32 0.0, %v203
  %v205 = vpop.f32.mrb[0].mxu0
  %v206 = vpop.f32.mrb[0].mxu0
  %v207 = vadd.f32 0.0, %v206
  %v208 = vpop.f32.mrb[0].mxu0
  %209 = vdwg.mxu0
  %v212 = vunpack.c.l.b16 %v90
  %v213 = vunpack.c.l.b16 %v91
  %v214 = vpack.c.b16 %v213, %v212
  %v217 = vunpack.c.l.b16 %v92
  %v218 = vunpack.c.h.b16 %v92
  %v219 = vunpack.c.l.b16 %v93
  %v220 = vpack.c.b16 %v217, %v217
  %v221 = vpack.c.b16 %v218, %v218
  %v222 = vpack.c.b16 %v219, %v219
  %v224 = vsel %vm112, %v214, 0
  %v227 = vsel %vm116, %v220, 0
  %v230 = vsel %vm116, %v221, 0
  %v233 = vsel %vm116, %v222, 0
  %235 = vmatprep.subr.bf16.mxu0 %v230
  %236 = vmatpush1.bf16.msra.mxu0 %v227
  %237 = vmatprep.subr.bf16.mxu0 0
  %238 = vmatpush1.bf16.msra.mxu0 0
  %239 = vmatprep.subr.bf16.mxu0 0
  %240 = vmatpush1.bf16.msra.mxu0 0
  %241 = vmatprep.subr.bf16.mxu0 0
  %242 = vmatpush1.bf16.msra.mxu0 0
  %243 = vmatprep.subr.bf16.mxu0 0
  %244 = vmatpush1.bf16.msra.mxu0 0
  %245 = vmatprep.subr.bf16.mxu0 0
  %246 = vmatpush1.bf16.msra.mxu0 0
  %247 = vmatprep.subr.bf16.mxu0 0
  %248 = vmatpush1.bf16.msra.mxu0 0
  %249 = vmatprep.subr.bf16.mxu0 0
  %250 = vmatpush1.bf16.msra.mxu0 0
  %251 = vmatprep.subr.bf16.mxu0 0
  %252 = vmatpush1.bf16.msra.mxu0 0
  %253 = vmatprep.subr.bf16.mxu0 0
  %254 = vmatpush1.bf16.msra.mxu0 0
  %255 = vmatprep.subr.bf16.mxu0 0
  %256 = vmatpush1.bf16.msra.mxu0 0
  %257 = vmatprep.subr.bf16.mxu0 0
  %258 = vmatpush1.bf16.msra.mxu0 0
  %259 = vmatprep.subr.bf16.mxu0 0
  %260 = vmatpush1.bf16.msra.mxu0 0
  %261 = vmatprep.subr.bf16.mxu0 0
  %262 = vmatpush1.bf16.msra.mxu0 0
  %263 = vmatprep.subr.bf16.mxu0 0
  %264 = vmatpush1.bf16.msra.mxu0 0
  %265 = vmatprep.subr.bf16.mxu0 0
  %266 = vmatpush1.bf16.msra.mxu0 0
  %267 = vmatprep.mubr.bf16.mxu0 0
  %268 = vmatmul.mubr.bf16.gmra.mrb[0].mxu0 %v224
  %v269 = vpop.f32.mrb[0].mxu0
  %v270 = vadd.f32 %v161, %v269
  %v271 = vpop.f32.mrb[0].mxu0
  %v272 = vadd.f32 %v163, %v271
  %v273 = vpop.f32.mrb[0].mxu0
  %v274 = vadd.f32 %v165, %v273
  %v275 = vpop.f32.mrb[0].mxu0
  %v276 = vadd.f32 %v167, %v275
  %277 = vdwg.mxu0
  %278 = vmatprep.subr.bf16.mxu0 0
  %279 = vmatpush1.bf16.msra.mxu0 %v233
  %280 = vmatprep.subr.bf16.mxu0 0
  %281 = vmatpush1.bf16.msra.mxu0 0
  %282 = vmatprep.subr.bf16.mxu0 0
  %283 = vmatpush1.bf16.msra.mxu0 0
  %284 = vmatprep.subr.bf16.mxu0 0
  %285 = vmatpush1.bf16.msra.mxu0 0
  %286 = vmatprep.subr.bf16.mxu0 0
  %287 = vmatpush1.bf16.msra.mxu0 0
  %288 = vmatprep.subr.bf16.mxu0 0
  %289 = vmatpush1.bf16.msra.mxu0 0
  %290 = vmatprep.subr.bf16.mxu0 0
  %291 = vmatpush1.bf16.msra.mxu0 0
  %292 = vmatprep.subr.bf16.mxu0 0
  %293 = vmatpush1.bf16.msra.mxu0 0
  %294 = vmatprep.subr.bf16.mxu0 0
  %295 = vmatpush1.bf16.msra.mxu0 0
  %296 = vmatprep.subr.bf16.mxu0 0
  %297 = vmatpush1.bf16.msra.mxu0 0
  %298 = vmatprep.subr.bf16.mxu0 0
  %299 = vmatpush1.bf16.msra.mxu0 0
  %300 = vmatprep.subr.bf16.mxu0 0
  %301 = vmatpush1.bf16.msra.mxu0 0
  %302 = vmatprep.subr.bf16.mxu0 0
  %303 = vmatpush1.bf16.msra.mxu0 0
  %304 = vmatprep.subr.bf16.mxu0 0
  %305 = vmatpush1.bf16.msra.mxu0 0
  %306 = vmatprep.subr.bf16.mxu0 0
  %307 = vmatpush1.bf16.msra.mxu0 0
  %308 = vmatprep.subr.bf16.mxu0 0
  %309 = vmatpush1.bf16.msra.mxu0 0
  %310 = vmatprep.mubr.bf16.mxu0 0
  %311 = vmatmul.mubr.bf16.gmra.mrb[0].mxu0 %v224
  %v312 = vpop.f32.mrb[0].mxu0
  %v313 = vadd.f32 %v204, %v312
  %v314 = vpop.f32.mrb[0].mxu0
  %v315 = vpop.f32.mrb[0].mxu0
  %v316 = vadd.f32 %v207, %v315
  %v317 = vpop.f32.mrb[0].mxu0
  %318 = vdwg.mxu0
  %v319 = vld [vmem:[%s3] sm:$0xff]
  %v320 = vld [vmem:[%s3 + $0x8] sm:$0xff]
  %v321 = vadd.f32 %v270, %v272
  %vm322 = vcmask 261120
  %v323 = vsel %vm322, %v313, 0.0
  %v324 = vadd.f32 %v321, %v323
  %325 = vadd.xlane.f32.xlu0 %v324
  %v326 = vpop.xlane.xlu0 %325
  %v327 = vadd.f32 %v274, %v276
  %v328 = vsel %vm322, %v316, 0.0
  %v329 = vadd.f32 %v327, %v328
  %330 = vadd.xlane.f32.xlu0 %v329
  %v331 = vpop.xlane.xlu0 %330
  %v332 = vadd.f32 %v319, %v326
  %v333 = vadd.f32 %v320, %v331
  %vm334 = vcmask 7168
  %335 = vst.msk [vmem:[%s3] sm:$0xff] %vm334, %v332
  %336 = vst.msk [vmem:[%s3 + $0x8] sm:$0xff] %vm334, %v333
  %v337 = vld [vmem:[%s4] sm:$0xff]
  %v338 = vld [vmem:[%s4 + $0x8] sm:$0xff]
  %v339 = vmul.f32 %v270, %v270
  %v340 = vmul.f32 %v272, %v272
  %v341 = vmul.f32 %v313, %v313
  %v342 = vmul.f32 %v274, %v274
  %v343 = vmul.f32 %v276, %v276
  %v344 = vmul.f32 %v316, %v316
  %v345 = vadd.f32 %v339, %v340
  %v346 = vsel %vm322, %v341, 0.0
  %v347 = vadd.f32 %v345, %v346
  %348 = vadd.xlane.f32.xlu0 %v347
  %v349 = vpop.xlane.xlu0 %348
  %v350 = vadd.f32 %v342, %v343
  %v351 = vsel %vm322, %v344, 0.0
  %v352 = vadd.f32 %v350, %v351
  %353 = vadd.xlane.f32.xlu0 %v352
  %v354 = vpop.xlane.xlu0 %353
  %v355 = vadd.f32 %v337, %v349
  %v356 = vadd.f32 %v338, %v354
  %357 = vst.msk [vmem:[%s4] sm:$0xff] %vm334, %v355
  %358 = vst.msk [vmem:[%s4 + $0x8] sm:$0xff] %vm334, %v356
  // Predicated region
  $region18: #{fourier_unit_forward.2} parent=0 // pred_check
    _
  $region19: #{fourier_unit_forward.2} parent=0 // pred_check_branch
    %360 = sbr.rel (0) target = $region21
  $region20: #{fourier_unit_forward.2} parent=0 // pred_region
    _
  $region21: #{fourier_unit_forward.2} parent=0 // pred_fallthru
    _
  // Predicated region
  $region22: #{fourier_unit_forward.2} parent=0 // pred_check
    _
  $region23: #{fourier_unit_forward.2} parent=0 // pred_check_branch
    %362 = sbr.rel (0) target = $region25
  $region24: #{fourier_unit_forward.2} parent=0 // pred_region
    _
  $region25: #{fourier_unit_forward.2} parent=0 // pred_fallthru
    _
  // Predicated region
  $region26: #{fourier_unit_forward.2} parent=0 // pred_check
    _
  $region27: #{fourier_unit_forward.2} parent=0 // pred_check_branch
    %364 = sbr.rel (0) target = $region29
  $region28: #{fourier_unit_forward.2} parent=0 // pred_region
    _
  $region29: #{fourier_unit_forward.2} parent=0 // pred_fallthru
    _
  // Predicated region
  $region30: #{fourier_unit_forward.2} parent=0 // pred_check
    _
  $region31: #{fourier_unit_forward.2} parent=0 // pred_check_branch
    %366 = sbr.rel (0) target = $region33
  $region32: #{fourier_unit_forward.2} parent=0 // pred_region
    _
  $region33: #{fourier_unit_forward.2} parent=0 // pred_fallthru
    _

// kernel: reverse.0
$region0: #{reverse.0}
  %s0 = inlined_call_operand.vmem [shape: f32[8,2,16,7], index: 0, kind: input, shape index: {}]
  %s1 = inlined_call_operand.vmem [shape: f32[8,2,16,7], index: 1, kind: output, shape index: {}]
  $region1: #{reverse.0} parent=0
    #allocation0 [shape = 'u8[131072]{0}', space=vmem, size = 0x20000, scoped, tag = 'operand span for operand 0']
    #allocation1 [shape = 'u8[65536]{0}', space=vmem, size = 0x10000, scoped, tag = 'operand span for operand 1']
    %s2 = scalar_lea.vmem [#allocation0], 8
    // Predicated region
    $region2: #{reverse.0} parent=1 // pred_check
      _
    $region3: #{reverse.0} parent=1 // pred_check_branch
      %4 = sbr.rel (0) target = $region5
    $region4: #{reverse.0} parent=1 // pred_region
      // Predicated region
      $region6: #{reverse.0} parent=4 // pred_check
        _
      $region7: #{reverse.0} parent=4 // pred_check_branch
        %6 = sbr.rel (0) target = $region9
      $region8: #{reverse.0} parent=4 // pred_region
        // Predicated region
        $region21: #{reverse.0} parent=8 // pred_check
          _
        $region22: #{reverse.0} parent=8 // pred_check_branch
          %51 = sbr.rel (0) target = $region24
        $region23: #{reverse.0} parent=8 // pred_region
          loop: start=0, step=1, limit=1
          $region25: #{reverse.0} parent=23 // loop_pre_header
            _
          $region26: #{reverse.0} parent=23 // loop_header
            %s53 = sphi 0, %s57
            %p54 = scmp.ge.s32.totalorder %s53, 1
            %s58 = sphi %s0, %s0
            %s59 = sphi %s2, %s2
          $region27: #{reverse.0} parent=23 // loop_header_branch
            %56 = sbr.rel (%p54) target = $region31
          $region28: #{reverse.0} parent=23 // loop_body
            %v60 = vld [vmem:[%s58] sm:$0xff]
            %61 = vst [vmem:[%s59] sm:$0xff] %v60
            %v62 = vld [vmem:[%s58 + $0x8] sm:$0xff]
            %63 = vst [vmem:[%s59 + $0x10] sm:$0xff] %v62
            %v64 = vld [vmem:[%s58 + $0x10] sm:$0xff]
            %65 = vst [vmem:[%s59 + $0x20] sm:$0xff] %v64
            %v66 = vld [vmem:[%s58 + $0x18] sm:$0xff]
            %67 = vst [vmem:[%s59 + $0x30] sm:$0xff] %v66
            %v68 = vld [vmem:[%s58 + $0x20] sm:$0xff]
            %69 = vst [vmem:[%s59 + $0x40] sm:$0xff] %v68
            %v70 = vld [vmem:[%s58 + $0x28] sm:$0xff]
            %71 = vst [vmem:[%s59 + $0x50] sm:$0xff] %v70
            %v72 = vld [vmem:[%s58 + $0x30] sm:$0xff]
            %73 = vst [vmem:[%s59 + $0x60] sm:$0xff] %v72
            %v74 = vld [vmem:[%s58 + $0x38] sm:$0xff]
            %75 = vst [vmem:[%s59 + $0x70] sm:$0xff] %v74
            %v76 = vld [vmem:[%s58 + $0x40] sm:$0xff]
            %77 = vst [vmem:[%s59 + $0x80] sm:$0xff] %v76
            %v78 = vld [vmem:[%s58 + $0x48] sm:$0xff]
            %79 = vst [vmem:[%s59 + $0x90] sm:$0xff] %v78
            %v80 = vld [vmem:[%s58 + $0x50] sm:$0xff]
            %81 = vst [vmem:[%s59 + $0xa0] sm:$0xff] %v80
            %v82 = vld [vmem:[%s58 + $0x58] sm:$0xff]
            %83 = vst [vmem:[%s59 + $0xb0] sm:$0xff] %v82
            %v84 = vld [vmem:[%s58 + $0x60] sm:$0xff]
            %85 = vst [vmem:[%s59 + $0xc0] sm:$0xff] %v84
            %v86 = vld [vmem:[%s58 + $0x68] sm:$0xff]
            %87 = vst [vmem:[%s59 + $0xd0] sm:$0xff] %v86
            %v88 = vld [vmem:[%s58 + $0x70] sm:$0xff]
            %89 = vst [vmem:[%s59 + $0xe0] sm:$0xff] %v88
            %v90 = vld [vmem:[%s58 + $0x78] sm:$0xff]
            %91 = vst [vmem:[%s59 + $0xf0] sm:$0xff] %v90
          $region29: #{reverse.0} parent=23 // loop_footer
            %s57 = sadd.s32 1, %s53
          $region30: #{reverse.0} parent=23 // loop_footer_branch
            %52 = sbr.rel target = $region26
          $region31: #{reverse.0} parent=23 // loop_exit
            _
        $region24: #{reverse.0} parent=8 // pred_fallthru
          _
        // Predicated region
        $region32: #{reverse.0} parent=8 // pred_check
          _
        $region33: #{reverse.0} parent=8 // pred_check_branch
          %93 = sbr.rel target = $region35
        $region34: #{reverse.0} parent=8 // pred_region
          _
        $region35: #{reverse.0} parent=8 // pred_fallthru
          _
      $region9: #{reverse.0} parent=4 // pred_fallthru
        _
      // Predicated region
      $region10: #{reverse.0} parent=4 // pred_check
        _
      $region11: #{reverse.0} parent=4 // pred_check_branch
        %8 = sbr.rel target = $region13
      $region12: #{reverse.0} parent=4 // pred_region
        loop: start=0, step=1, limit=1
        $region14: #{reverse.0} parent=12 // loop_pre_header
          _
        $region15: #{reverse.0} parent=12 // loop_header
          %s11 = sphi 0, %s15
          %p12 = scmp.ge.s32.totalorder %s11, 1
          %s16 = sphi %s0, %s0
          %s17 = sphi %s2, %s2
        $region16: #{reverse.0} parent=12 // loop_header_branch
          %14 = sbr.rel (%p12) target = $region20
        $region17: #{reverse.0} parent=12 // loop_body
          %v18 = vld [vmem:[%s16] sm:$0xff]
          %19 = vst [vmem:[%s17] sm:$0xff] %v18
          %v20 = vld [vmem:[%s16 + $0x8] sm:$0xff]
          %21 = vst [vmem:[%s17 + $0x10] sm:$0xff] %v20
          %v22 = vld [vmem:[%s16 + $0x10] sm:$0xff]
          %23 = vst [vmem:[%s17 + $0x20] sm:$0xff] %v22
          %v24 = vld [vmem:[%s16 + $0x18] sm:$0xff]
          %25 = vst [vmem:[%s17 + $0x30] sm:$0xff] %v24
          %v26 = vld [vmem:[%s16 + $0x20] sm:$0xff]
          %27 = vst [vmem:[%s17 + $0x40] sm:$0xff] %v26
          %v28 = vld [vmem:[%s16 + $0x28] sm:$0xff]
          %29 = vst [vmem:[%s17 + $0x50] sm:$0xff] %v28
          %v30 = vld [vmem:[%s16 + $0x30] sm:$0xff]
          %31 = vst [vmem:[%s17 + $0x60] sm:$0xff] %v30
          %v32 = vld [vmem:[%s16 + $0x38] sm:$0xff]
          %33 = vst [vmem:[%s17 + $0x70] sm:$0xff] %v32
          %v34 = vld [vmem:[%s16 + $0x40] sm:$0xff]
          %35 = vst [vmem:[%s17 + $0x80] sm:$0xff] %v34
          %v36 = vld [vmem:[%s16 + $0x48] sm:$0xff]
          %37 = vst [vmem:[%s17 + $0x90] sm:$0xff] %v36
          %v38 = vld [vmem:[%s16 + $0x50] sm:$0xff]
          %39 = vst [vmem:[%s17 + $0xa0] sm:$0xff] %v38
          %v40 = vld [vmem:[%s16 + $0x58] sm:$0xff]
          %41 = vst [vmem:[%s17 + $0xb0] sm:$0xff] %v40
          %v42 = vld [vmem:[%s16 + $0x60] sm:$0xff]
          %43 = vst [vmem:[%s17 + $0xc0] sm:$0xff] %v42
          %v44 = vld [vmem:[%s16 + $0x68] sm:$0xff]
          %45 = vst [vmem:[%s17 + $0xd0] sm:$0xff] %v44
          %v46 = vld [vmem:[%s16 + $0x70] sm:$0xff]
          %47 = vst [vmem:[%s17 + $0xe0] sm:$0xff] %v46
          %v48 = vld [vmem:[%s16 + $0x78] sm:$0xff]
          %49 = vst [vmem:[%s17 + $0xf0] sm:$0xff] %v48
        $region18: #{reverse.0} parent=12 // loop_footer
          %s15 = sadd.s32 1, %s11
        $region19: #{reverse.0} parent=12 // loop_footer_branch
          %10 = sbr.rel target = $region15
        $region20: #{reverse.0} parent=12 // loop_exit
          _
      $region13: #{reverse.0} parent=4 // pred_fallthru
        _
    $region5: #{reverse.0} parent=1 // pred_fallthru
      _
    %94 = vnop
    %s95 = scalar_lea.vmem [#allocation0], 7
    %v96 = vld [vmem:[%s95] ss:$-1 sm:$0xff]
    %v97 = vrot.slane %v96, 1
    %98 = vst [vmem:[#allocation1] sm:$0xff] %v97
    %s99 = scalar_lea.vmem [#allocation0], 8
    %s100 = scalar_lea.vmem %s99, 7 [#allocation0]
    %v101 = vld [vmem:[%s100] ss:$-1 sm:$0xff]
    %v102 = vrot.slane %v101, 1
    %v103 = vlaneseq
    %v104 = vshrl.u32 %v103, 7
    %vm105 = vcmp.lt.s32.totalorder %v104, 7
    %106 = vst.msk [vmem:[#allocation1] sm:$0xff] %vm105, %v102
    %s107 = scalar_lea.vmem [#allocation1], 8
    %s108 = scalar_lea.vmem [#allocation0], 16
    %s109 = scalar_lea.vmem %s108, 7 [#allocation0]
    %v110 = vld [vmem:[%s109] ss:$-1 sm:$0xff]
    %v111 = vrot.slane %v110, 1
    %112 = vst [vmem:[%s107] sm:$0xff] %v111
    %s113 = scalar_lea.vmem %s108, 8 [#allocation0]
    %s114 = scalar_lea.vmem %s113, 7 [#allocation0]
    %v115 = vld [vmem:[%s114] ss:$-1 sm:$0xff]
    %v116 = vrot.slane %v115, 1
    %v117 = vlaneseq
    %v118 = vshrl.u32 %v117, 7
    %vm119 = vcmp.lt.s32.totalorder %v118, 7
    %120 = vst.msk [vmem:[%s107] sm:$0xff] %vm119, %v116
    %s121 = scalar_lea.vmem [#allocation1], 16
    %s122 = scalar_lea.vmem [#allocation0], 32
    %s123 = scalar_lea.vmem %s122, 7 [#allocation0]
    %v124 = vld [vmem:[%s123] ss:$-1 sm:$0xff]
    %v125 = vrot.slane %v124, 1
    %126 = vst [vmem:[%s121] sm:$0xff] %v125
    %s127 = scalar_lea.vmem %s122, 8 [#allocation0]
    %s128 = scalar_lea.vmem %s127, 7 [#allocation0]
    %v129 = vld [vmem:[%s128] ss:$-1 sm:$0xff]
    %v130 = vrot.slane %v129, 1
    %v131 = vlaneseq
    %v132 = vshrl.u32 %v131, 7
    %vm133 = vcmp.lt.s32.totalorder %v132, 7
    %134 = vst.msk [vmem:[%s121] sm:$0xff] %vm133, %v130
    %s135 = scalar_lea.vmem [#allocation1], 24
    %s136 = scalar_lea.vmem [#allocation0], 48
    %s137 = scalar_lea.vmem %s136, 7 [#allocation0]
    %v138 = vld [vmem:[%s137] ss:$-1 sm:$0xff]
    %v139 = vrot.slane %v138, 1
    %140 = vst [vmem:[%s135] sm:$0xff] %v139
    %s141 = scalar_lea.vmem %s136, 8 [#allocation0]
    %s142 = scalar_lea.vmem %s141, 7 [#allocation0]
    %v143 = vld [vmem:[%s142] ss:$-1 sm:$0xff]
    %v144 = vrot.slane %v143, 1
    %v145 = vlaneseq
    %v146 = vshrl.u32 %v145, 7
    %vm147 = vcmp.lt.s32.totalorder %v146, 7
    %148 = vst.msk [vmem:[%s135] sm:$0xff] %vm147, %v144
    %s149 = scalar_lea.vmem [#allocation1], 32
    %s150 = scalar_lea.vmem [#allocation0], 64
    %s151 = scalar_lea.vmem %s150, 7 [#allocation0]
    %v152 = vld [vmem:[%s151] ss:$-1 sm:$0xff]
    %v153 = vrot.slane %v152, 1
    %154 = vst [vmem:[%s149] sm:$0xff] %v153
    %s155 = scalar_lea.vmem %s150, 8 [#allocation0]
    %s156 = scalar_lea.vmem %s155, 7 [#allocation0]
    %v157 = vld [vmem:[%s156] ss:$-1 sm:$0xff]
    %v158 = vrot.slane %v157, 1
    %v159 = vlaneseq
    %v160 = vshrl.u32 %v159, 7
    %vm161 = vcmp.lt.s32.totalorder %v160, 7
    %162 = vst.msk [vmem:[%s149] sm:$0xff] %vm161, %v158
    %s163 = scalar_lea.vmem [#allocation1], 40
    %s164 = scalar_lea.vmem [#allocation0], 80
    %s165 = scalar_lea.vmem %s164, 7 [#allocation0]
    %v166 = vld [vmem:[%s165] ss:$-1 sm:$0xff]
    %v167 = vrot.slane %v166, 1
    %168 = vst [vmem:[%s163] sm:$0xff] %v167
    %s169 = scalar_lea.vmem %s164, 8 [#allocation0]
    %s170 = scalar_lea.vmem %s169, 7 [#allocation0]
    %v171 = vld [vmem:[%s170] ss:$-1 sm:$0xff]
    %v172 = vrot.slane %v171, 1
    %v173 = vlaneseq
    %v174 = vshrl.u32 %v173, 7
    %vm175 = vcmp.lt.s32.totalorder %v174, 7
    %176 = vst.msk [vmem:[%s163] sm:$0xff] %vm175, %v172
    %s177 = scalar_lea.vmem [#allocation1], 48
    %s178 = scalar_lea.vmem [#allocation0], 96
    %s179 = scalar_lea.vmem %s178, 7 [#allocation0]
    %v180 = vld [vmem:[%s179] ss:$-1 sm:$0xff]
    %v181 = vrot.slane %v180, 1
    %182 = vst [vmem:[%s177] sm:$0xff] %v181
    %s183 = scalar_lea.vmem %s178, 8 [#allocation0]
    %s184 = scalar_lea.vmem %s183, 7 [#allocation0]
    %v185 = vld [vmem:[%s184] ss:$-1 sm:$0xff]
    %v186 = vrot.slane %v185, 1
    %v187 = vlaneseq
    %v188 = vshrl.u32 %v187, 7
    %vm189 = vcmp.lt.s32.totalorder %v188, 7
    %190 = vst.msk [vmem:[%s177] sm:$0xff] %vm189, %v186
    %s191 = scalar_lea.vmem [#allocation1], 56
    %s192 = scalar_lea.vmem [#allocation0], 112
    %s193 = scalar_lea.vmem %s192, 7 [#allocation0]
    %v194 = vld [vmem:[%s193] ss:$-1 sm:$0xff]
    %v195 = vrot.slane %v194, 1
    %196 = vst [vmem:[%s191] sm:$0xff] %v195
    %s197 = scalar_lea.vmem %s192, 8 [#allocation0]
    %s198 = scalar_lea.vmem %s197, 7 [#allocation0]
    %v199 = vld [vmem:[%s198] ss:$-1 sm:$0xff]
    %v200 = vrot.slane %v199, 1
    %v201 = vlaneseq
    %v202 = vshrl.u32 %v201, 7
    %vm203 = vcmp.lt.s32.totalorder %v202, 7
    %204 = vst.msk [vmem:[%s191] sm:$0xff] %vm203, %v200
    %s205 = scalar_lea.vmem [#allocation1], 64
    %s206 = scalar_lea.vmem [#allocation0], 128
    %s207 = scalar_lea.vmem %s206, 7 [#allocation0]
    %v208 = vld [vmem:[%s207] ss:$-1 sm:$0xff]
    %v209 = vrot.slane %v208, 1
    %210 = vst [vmem:[%s205] sm:$0xff] %v209
    %s211 = scalar_lea.vmem %s206, 8 [#allocation0]
    %s212 = scalar_lea.vmem %s211, 7 [#allocation0]
    %v213 = vld [vmem:[%s212] ss:$-1 sm:$0xff]
    %v214 = vrot.slane %v213, 1
    %v215 = vlaneseq
    %v216 = vshrl.u32 %v215, 7
    %vm217 = vcmp.lt.s32.totalorder %v216, 7
    %218 = vst.msk [vmem:[%s205] sm:$0xff] %vm217, %v214
    %s219 = scalar_lea.vmem [#allocation1], 72
    %s220 = scalar_lea.vmem [#allocation0], 144
    %s221 = scalar_lea.vmem %s220, 7 [#allocation0]
    %v222 = vld [vmem:[%s221] ss:$-1 sm:$0xff]
    %v223 = vrot.slane %v222, 1
    %224 = vst [vmem:[%s219] sm:$0xff] %v223
    %s225 = scalar_lea.vmem %s220, 8 [#allocation0]
    %s226 = scalar_lea.vmem %s225, 7 [#allocation0]
    %v227 = vld [vmem:[%s226] ss:$-1 sm:$0xff]
    %v228 = vrot.slane %v227, 1
    %v229 = vlaneseq
    %v230 = vshrl.u32 %v229, 7
    %vm231 = vcmp.lt.s32.totalorder %v230, 7
    %232 = vst.msk [vmem:[%s219] sm:$0xff] %vm231, %v228
    %s233 = scalar_lea.vmem [#allocation1], 80
    %s234 = scalar_lea.vmem [#allocation0], 160
    %s235 = scalar_lea.vmem %s234, 7 [#allocation0]
    %v236 = vld [vmem:[%s235] ss:$-1 sm:$0xff]
    %v237 = vrot.slane %v236, 1
    %238 = vst [vmem:[%s233] sm:$0xff] %v237
    %s239 = scalar_lea.vmem %s234, 8 [#allocation0]
    %s240 = scalar_lea.vmem %s239, 7 [#allocation0]
    %v241 = vld [vmem:[%s240] ss:$-1 sm:$0xff]
    %v242 = vrot.slane %v241, 1
    %v243 = vlaneseq
    %v244 = vshrl.u32 %v243, 7
    %vm245 = vcmp.lt.s32.totalorder %v244, 7
    %246 = vst.msk [vmem:[%s233] sm:$0xff] %vm245, %v242
    %s247 = scalar_lea.vmem [#allocation1], 88
    %s248 = scalar_lea.vmem [#allocation0], 176
    %s249 = scalar_lea.vmem %s248, 7 [#allocation0]
    %v250 = vld [vmem:[%s249] ss:$-1 sm:$0xff]
    %v251 = vrot.slane %v250, 1
    %252 = vst [vmem:[%s247] sm:$0xff] %v251
    %s253 = scalar_lea.vmem %s248, 8 [#allocation0]
    %s254 = scalar_lea.vmem %s253, 7 [#allocation0]
    %v255 = vld [vmem:[%s254] ss:$-1 sm:$0xff]
    %v256 = vrot.slane %v255, 1
    %v257 = vlaneseq
    %v258 = vshrl.u32 %v257, 7
    %vm259 = vcmp.lt.s32.totalorder %v258, 7
    %260 = vst.msk [vmem:[%s247] sm:$0xff] %vm259, %v256
    %s261 = scalar_lea.vmem [#allocation1], 96
    %s262 = scalar_lea.vmem [#allocation0], 192
    %s263 = scalar_lea.vmem %s262, 7 [#allocation0]
    %v264 = vld [vmem:[%s263] ss:$-1 sm:$0xff]
    %v265 = vrot.slane %v264, 1
    %266 = vst [vmem:[%s261] sm:$0xff] %v265
    %s267 = scalar_lea.vmem %s262, 8 [#allocation0]
    %s268 = scalar_lea.vmem %s267, 7 [#allocation0]
    %v269 = vld [vmem:[%s268] ss:$-1 sm:$0xff]
    %v270 = vrot.slane %v269, 1
    %v271 = vlaneseq
    %v272 = vshrl.u32 %v271, 7
    %vm273 = vcmp.lt.s32.totalorder %v272, 7
    %274 = vst.msk [vmem:[%s261] sm:$0xff] %vm273, %v270
    %s275 = scalar_lea.vmem [#allocation1], 104
    %s276 = scalar_lea.vmem [#allocation0], 208
    %s277 = scalar_lea.vmem %s276, 7 [#allocation0]
    %v278 = vld [vmem:[%s277] ss:$-1 sm:$0xff]
    %v279 = vrot.slane %v278, 1
    %280 = vst [vmem:[%s275] sm:$0xff] %v279
    %s281 = scalar_lea.vmem %s276, 8 [#allocation0]
    %s282 = scalar_lea.vmem %s281, 7 [#allocation0]
    %v283 = vld [vmem:[%s282] ss:$-1 sm:$0xff]
    %v284 = vrot.slane %v283, 1
    %v285 = vlaneseq
    %v286 = vshrl.u32 %v285, 7
    %vm287 = vcmp.lt.s32.totalorder %v286, 7
    %288 = vst.msk [vmem:[%s275] sm:$0xff] %vm287, %v284
    %s289 = scalar_lea.vmem [#allocation1], 112
    %s290 = scalar_lea.vmem [#allocation0], 224
    %s291 = scalar_lea.vmem %s290, 7 [#allocation0]
    %v292 = vld [vmem:[%s291] ss:$-1 sm:$0xff]
    %v293 = vrot.slane %v292, 1
    %294 = vst [vmem:[%s289] sm:$0xff] %v293
    %s295 = scalar_lea.vmem %s290, 8 [#allocation0]
    %s296 = scalar_lea.vmem %s295, 7 [#allocation0]
    %v297 = vld [vmem:[%s296] ss:$-1 sm:$0xff]
    %v298 = vrot.slane %v297, 1
    %v299 = vlaneseq
    %v300 = vshrl.u32 %v299, 7
    %vm301 = vcmp.lt.s32.totalorder %v300, 7
    %302 = vst.msk [vmem:[%s289] sm:$0xff] %vm301, %v298
    %s303 = scalar_lea.vmem [#allocation1], 120
    %s304 = scalar_lea.vmem [#allocation0], 240
    %s305 = scalar_lea.vmem %s304, 7 [#allocation0]
    %v306 = vld [vmem:[%s305] ss:$-1 sm:$0xff]
    %v307 = vrot.slane %v306, 1
    %308 = vst [vmem:[%s303] sm:$0xff] %v307
    %s309 = scalar_lea.vmem %s304, 8 [#allocation0]
    %s310 = scalar_lea.vmem %s309, 7 [#allocation0]
    %v311 = vld [vmem:[%s310] ss:$-1 sm:$0xff]
    %v312 = vrot.slane %v311, 1
    %v313 = vlaneseq
    %v314 = vshrl.u32 %v313, 7
    %vm315 = vcmp.lt.s32.totalorder %v314, 7
    %316 = vst.msk [vmem:[%s303] sm:$0xff] %vm315, %v312
    // Predicated region
    $region36: #{reverse.0} parent=1 // pred_check
      _
    $region37: #{reverse.0} parent=1 // pred_check_branch
      %318 = sbr.rel (0) target = $region39
    $region38: #{reverse.0} parent=1 // pred_region
      // Predicated region
      $region40: #{reverse.0} parent=38 // pred_check
        _
      $region41: #{reverse.0} parent=38 // pred_check_branch
        %320 = sbr.rel (0) target = $region43
      $region42: #{reverse.0} parent=38 // pred_region
        // Predicated region
        $region55: #{reverse.0} parent=42 // pred_check
          _
        $region56: #{reverse.0} parent=42 // pred_check_branch
          %365 = sbr.rel (0) target = $region58
        $region57: #{reverse.0} parent=42 // pred_region
          loop: start=0, step=1, limit=1
          $region59: #{reverse.0} parent=57 // loop_pre_header
            _
          $region60: #{reverse.0} parent=57 // loop_header
            %s367 = sphi 0, %s371
            %p368 = scmp.ge.s32.totalorder %s367, 1
            %s372 = sphi [#allocation1], [#allocation1]
            %s373 = sphi %s1, %s1
          $region61: #{reverse.0} parent=57 // loop_header_branch
            %370 = sbr.rel (%p368) target = $region65
          $region62: #{reverse.0} parent=57 // loop_body
            %v374 = vld [vmem:[%s372] sm:$0xff]
            %375 = vst [vmem:[%s373] sm:$0xff] %v374
            %v376 = vld [vmem:[%s372 + $0x8] sm:$0xff]
            %377 = vst [vmem:[%s373 + $0x8] sm:$0xff] %v376
            %v378 = vld [vmem:[%s372 + $0x10] sm:$0xff]
            %379 = vst [vmem:[%s373 + $0x10] sm:$0xff] %v378
            %v380 = vld [vmem:[%s372 + $0x18] sm:$0xff]
            %381 = vst [vmem:[%s373 + $0x18] sm:$0xff] %v380
            %v382 = vld [vmem:[%s372 + $0x20] sm:$0xff]
            %383 = vst [vmem:[%s373 + $0x20] sm:$0xff] %v382
            %v384 = vld [vmem:[%s372 + $0x28] sm:$0xff]
            %385 = vst [vmem:[%s373 + $0x28] sm:$0xff] %v384
            %v386 = vld [vmem:[%s372 + $0x30] sm:$0xff]
            %387 = vst [vmem:[%s373 + $0x30] sm:$0xff] %v386
            %v388 = vld [vmem:[%s372 + $0x38] sm:$0xff]
            %389 = vst [vmem:[%s373 + $0x38] sm:$0xff] %v388
            %v390 = vld [vmem:[%s372 + $0x40] sm:$0xff]
            %391 = vst [vmem:[%s373 + $0x40] sm:$0xff] %v390
            %v392 = vld [vmem:[%s372 + $0x48] sm:$0xff]
            %393 = vst [vmem:[%s373 + $0x48] sm:$0xff] %v392
            %v394 = vld [vmem:[%s372 + $0x50] sm:$0xff]
            %395 = vst [vmem:[%s373 + $0x50] sm:$0xff] %v394
            %v396 = vld [vmem:[%s372 + $0x58] sm:$0xff]
            %397 = vst [vmem:[%s373 + $0x58] sm:$0xff] %v396
            %v398 = vld [vmem:[%s372 + $0x60] sm:$0xff]
            %399 = vst [vmem:[%s373 + $0x60] sm:$0xff] %v398
            %v400 = vld [vmem:[%s372 + $0x68] sm:$0xff]
            %401 = vst [vmem:[%s373 + $0x68] sm:$0xff] %v400
            %v402 = vld [vmem:[%s372 + $0x70] sm:$0xff]
            %403 = vst [vmem:[%s373 + $0x70] sm:$0xff] %v402
            %v404 = vld [vmem:[%s372 + $0x78] sm:$0xff]
            %405 = vst [vmem:[%s373 + $0x78] sm:$0xff] %v404
          $region63: #{reverse.0} parent=57 // loop_footer
            %s371 = sadd.s32 1, %s367
          $region64: #{reverse.0} parent=57 // loop_footer_branch
            %366 = sbr.rel target = $region60
          $region65: #{reverse.0} parent=57 // loop_exit
            _
        $region58: #{reverse.0} parent=42 // pred_fallthru
          _
        // Predicated region
        $region66: #{reverse.0} parent=42 // pred_check
          _
        $region67: #{reverse.0} parent=42 // pred_check_branch
          %407 = sbr.rel target = $region69
        $region68: #{reverse.0} parent=42 // pred_region
          _
        $region69: #{reverse.0} parent=42 // pred_fallthru
          _
      $region43: #{reverse.0} parent=38 // pred_fallthru
        _
      // Predicated region
      $region44: #{reverse.0} parent=38 // pred_check
        _
      $region45: #{reverse.0} parent=38 // pred_check_branch
        %322 = sbr.rel target = $region47
      $region46: #{reverse.0} parent=38 // pred_region
        loop: start=0, step=1, limit=1
        $region48: #{reverse.0} parent=46 // loop_pre_header
          _
        $region49: #{reverse.0} parent=46 // loop_header
          %s325 = sphi 0, %s329
          %p326 = scmp.ge.s32.totalorder %s325, 1
          %s330 = sphi [#allocation1], [#allocation1]
          %s331 = sphi %s1, %s1
        $region50: #{reverse.0} parent=46 // loop_header_branch
          %328 = sbr.rel (%p326) target = $region54
        $region51: #{reverse.0} parent=46 // loop_body
          %v332 = vld [vmem:[%s330] sm:$0xff]
          %333 = vst [vmem:[%s331] sm:$0xff] %v332
          %v334 = vld [vmem:[%s330 + $0x8] sm:$0xff]
          %335 = vst [vmem:[%s331 + $0x8] sm:$0xff] %v334
          %v336 = vld [vmem:[%s330 + $0x10] sm:$0xff]
          %337 = vst [vmem:[%s331 + $0x10] sm:$0xff] %v336
          %v338 = vld [vmem:[%s330 + $0x18] sm:$0xff]
          %339 = vst [vmem:[%s331 + $0x18] sm:$0xff] %v338
          %v340 = vld [vmem:[%s330 + $0x20] sm:$0xff]
          %341 = vst [vmem:[%s331 + $0x20] sm:$0xff] %v340
          %v342 = vld [vmem:[%s330 + $0x28] sm:$0xff]
          %343 = vst [vmem:[%s331 + $0x28] sm:$0xff] %v342
          %v344 = vld [vmem:[%s330 + $0x30] sm:$0xff]
          %345 = vst [vmem:[%s331 + $0x30] sm:$0xff] %v344
          %v346 = vld [vmem:[%s330 + $0x38] sm:$0xff]
          %347 = vst [vmem:[%s331 + $0x38] sm:$0xff] %v346
          %v348 = vld [vmem:[%s330 + $0x40] sm:$0xff]
          %349 = vst [vmem:[%s331 + $0x40] sm:$0xff] %v348
          %v350 = vld [vmem:[%s330 + $0x48] sm:$0xff]
          %351 = vst [vmem:[%s331 + $0x48] sm:$0xff] %v350
          %v352 = vld [vmem:[%s330 + $0x50] sm:$0xff]
          %353 = vst [vmem:[%s331 + $0x50] sm:$0xff] %v352
          %v354 = vld [vmem:[%s330 + $0x58] sm:$0xff]
          %355 = vst [vmem:[%s331 + $0x58] sm:$0xff] %v354
          %v356 = vld [vmem:[%s330 + $0x60] sm:$0xff]
          %357 = vst [vmem:[%s331 + $0x60] sm:$0xff] %v356
          %v358 = vld [vmem:[%s330 + $0x68] sm:$0xff]
          %359 = vst [vmem:[%s331 + $0x68] sm:$0xff] %v358
          %v360 = vld [vmem:[%s330 + $0x70] sm:$0xff]
          %361 = vst [vmem:[%s331 + $0x70] sm:$0xff] %v360
          %v362 = vld [vmem:[%s330 + $0x78] sm:$0xff]
          %363 = vst [vmem:[%s331 + $0x78] sm:$0xff] %v362
        $region52: #{reverse.0} parent=46 // loop_footer
          %s329 = sadd.s32 1, %s325
        $region53: #{reverse.0} parent=46 // loop_footer_branch
          %324 = sbr.rel target = $region49
        $region54: #{reverse.0} parent=46 // loop_exit
          _
      $region47: #{reverse.0} parent=38 // pred_fallthru
        _
    $region39: #{reverse.0} parent=1 // pred_fallthru
      _
    %408 = vnop

</llo_original>
